<compile_context>
chip_gen: v7x
topology: tpu7x:2x2x1
jax: 0.10.0
libtpu: 0.0.40
codegen_flags: <defaults>
</compile_context>

<pallas_src>
import functools
import math

import jax
import jax.numpy as jnp
from jax.experimental import pallas as pl
from jax.experimental.pallas import tpu as pltpu


def _layer_norm(x, gamma, beta, eps):
    mean = jnp.mean(x, axis=-1, keepdims=True)
    var = jnp.mean(jnp.square(x - mean), axis=-1, keepdims=True)
    return (x - mean) * jax.lax.rsqrt(var + eps) * gamma + beta


def _gelu_tanh(x):
    # tanh-form GELU; transcendental lands on the EUP slot. Max abs deviation
    # from exact erf-GELU is ~1e-3, well inside the bf16-matmul tolerance.
    c = math.sqrt(2.0 / math.pi)
    return 0.5 * x * (1.0 + jnp.tanh(c * (x + 0.044715 * x * x * x)))


def transformer_block_kernel(
    x_ref,      # (Bblk, L, E)   input dtype
    wqkv_ref,   # (E, 3E)        bf16  in_proj.weight.T
    wo_ref,     # (E, E)         bf16  out_proj.weight.T
    w1_ref,     # (E, Hd)        bf16  linear1.weight.T
    w2_ref,     # (Hd, Do)       bf16  linear2.weight.T
    vec_ref,    # (8, P)         f32   packed biases / LayerNorm affines
    y_ref,      # (Bblk, L, Do)
    attn_ref,   # (Bblk, L, L)
    *, heads, eps, scale,
):
    Bblk, L, E = x_ref.shape
    H = heads
    D = E // H
    Hd = w1_ref.shape[1]
    Do = w2_ref.shape[1]
    M = Bblk * L

    x = x_ref[...].astype(jnp.float32)          # (Bblk, L, E)
    xm = x.reshape(M, E)                         # fold batch rows onto MXU M axis

    vec = vec_ref[...]                           # single packed DMA
    bqkv = vec[0, :3 * E]
    bo = vec[1, :E]
    b1 = vec[2, :Hd]
    b2 = vec[3, :Do]
    g1, bt1 = vec[4, :E], vec[5, :E]
    g2, bt2 = vec[6, :Do], vec[7, :Do]

    # ---- QKV in-projection: one (M, E) x (E, 3E) MXU dot (f32 accumulate) ----
    qkv = jnp.dot(xm.astype(jnp.bfloat16), wqkv_ref[...],
                  preferred_element_type=jnp.float32) + bqkv           # (M, 3E)

    def split_heads(t):   # (M, E) f32 -> (Bblk*H, L, D) bf16
        parts = [t[:, h * D:(h + 1) * D].reshape(Bblk, 1, L, D) for h in range(H)]
        th = jnp.concatenate(parts, axis=1)                            # (Bblk,H,L,D)
        return th.reshape(Bblk * H, L, D).astype(jnp.bfloat16)

    qh = split_heads(qkv[:, :E] * scale)         # 1/sqrt(D) applied in f32
    kh = split_heads(qkv[:, E:2 * E])
    vh = split_heads(qkv[:, 2 * E:])

    # ---- attention, batched over (batch*head); softmax kept in f32 ----
    s = jnp.einsum('bld,bmd->blm', qh, kh,
                   preferred_element_type=jnp.float32)                 # (BH, L, L)
    s = s - jnp.max(s, axis=-1, keepdims=True)
    p = jnp.exp(s)
    inv = pl.reciprocal(jnp.sum(p, axis=-1, keepdims=True), approx=True)
    p = p * inv

    # averaged attention weights over heads (average_attn_weights=True)
    p_bh = p.reshape(Bblk, H, L, L)
    attn_ref[...] = (jnp.sum(p_bh, axis=1) * (1.0 / H)).astype(attn_ref.dtype)

    ctx = jnp.einsum('blm,bmd->bld', p.astype(jnp.bfloat16), vh,
                     preferred_element_type=jnp.float32)               # (BH, L, D)

    # merge heads (torch concat order) and out-project with ONE full-K matmul
    ctx = ctx.reshape(Bblk, H, L, D)
    ctx_m = jnp.concatenate([ctx[:, h] for h in range(H)], axis=-1)    # (Bblk, L, E)
    ctx_m = ctx_m.reshape(M, E).astype(jnp.bfloat16)
    attn_out = jnp.dot(ctx_m, wo_ref[...],
                       preferred_element_type=jnp.float32) + bo        # (M, E)

    # dropout = identity (eval); residual + LayerNorm1 (f32)
    h1 = _layer_norm(xm + attn_out, g1, bt1, eps)

    # ---- feed-forward (no residual in this module) + LayerNorm2 ----
    ff = jnp.dot(h1.astype(jnp.bfloat16), w1_ref[...],
                 preferred_element_type=jnp.float32) + b1
    ff = _gelu_tanh(ff)
    ff = jnp.dot(ff.astype(jnp.bfloat16), w2_ref[...],
                 preferred_element_type=jnp.float32) + b2
    y = _layer_norm(ff, g2, bt2, eps)

    y_ref[...] = y.reshape(Bblk, L, Do).astype(y_ref.dtype)


def _vmem_capacity_bytes():
    # Generation-aware VMEM capacity (v5e/v6e: 128 MiB, v7x: 64 MiB per core).
    try:
        cap = getattr(pltpu.get_tpu_info(), "vmem_capacity_bytes", None)
        if cap:
            return int(cap)
    except Exception:  # info query only; never masks kernel/lowering errors
        pass
    return 64 * 1024 * 1024  # conservative default (v7x per-core figure)


def _pick_block_batch(B, L, E, Hd, heads, vmem_cap):
    # Largest divisor of B whose rows roughly fill the MXU M target (~256) and
    # whose f32 intermediates stay well inside VMEM.
    # TODO(synk): pad the batch instead of requiring a divisor for large prime B.
    target_rows = 256
    D = E // heads
    best = 1
    for cand in range(1, B + 1):
        if B % cand:
            continue
        M = cand * L
        if M > max(target_rows, L):
            continue
        inter = 4 * (M * 3 * E + 4 * cand * heads * L * D
                     + 3 * cand * heads * L * L + 3 * M * E + M * Hd)
        if inter <= vmem_cap // 3:
            best = cand
    return best


def transformer_encoder_block(x, params, *, heads=4, eps=1e-5):
    B, L, E = x.shape
    Hd = params["lin1_w"].shape[0]
    Do = params["lin2_w"].shape[0]
    D = E // heads
    scale = 1.0 / math.sqrt(D)

    # ---- weight prep (constant folding outside the kernel) ----
    wqkv = params["in_proj_w"].T.astype(jnp.bfloat16)        # (E, 3E)
    wo = params["out_proj_w"].T.astype(jnp.bfloat16)         # (E, E)
    w1 = params["lin1_w"].T.astype(jnp.bfloat16)             # (E, Hd)
    w2 = params["lin2_w"].T.astype(jnp.bfloat16)             # (Hd, Do)

    # pack the 8 small bias / LayerNorm vectors into one (8, P) f32 operand
    P = max(3 * E, E, Hd, Do)
    P = ((P + 127) // 128) * 128

    def _row(v):
        v = v.astype(jnp.float32).reshape(-1)
        return jnp.pad(v, (0, P - v.shape[0]))

    vec = jnp.stack([
        _row(params["in_proj_b"]),    # 0: QKV bias (3E)
        _row(params["out_proj_b"]),   # 1: out-proj bias (E)
        _row(params["lin1_b"]),       # 2: FFN bias 1 (Hd)
        _row(params["lin2_b"]),       # 3: FFN bias 2 (Do)
        _row(params["ln1_g"]),        # 4: LayerNorm1 gamma (E)
        _row(params["ln1_b"]),        # 5: LayerNorm1 beta  (E)
        _row(params["ln2_g"]),        # 6: LayerNorm2 gamma (Do)
        _row(params["ln2_b"]),        # 7: LayerNorm2 beta  (Do)
    ])

    vmem_cap = _vmem_capacity_bytes()
    bblk = _pick_block_batch(B, L, E, Hd, heads, vmem_cap)
    nb = B // bblk
    M = bblk * L

    # ---- VMEM budget: double-buffered operands + f32 intermediates ----
    def nbytes(a):
        return int(a.size) * a.dtype.itemsize

    weights = [wqkv, wo, w1, w2, vec]
    io_bytes = (x.dtype.itemsize * bblk * L * E          # x block
                + x.dtype.itemsize * M * Do              # y block
                + 4 * bblk * L * L                       # attn block (f32)
                + sum(nbytes(a) for a in weights))
    est = 2 * io_bytes                                   # default double buffering
    est += 4 * (M * 3 * E + 4 * bblk * heads * L * D
                + 3 * bblk * heads * L * L + 3 * M * E + M * Hd + 2 * M * Do)
    est += 8 * 1024 * 1024                               # compiler headroom
    vmem_limit = int(min(max(est, 32 * 1024 * 1024),
                         max(vmem_cap - 8 * 1024 * 1024, 32 * 1024 * 1024)))

    kernel = functools.partial(transformer_block_kernel,
                               heads=heads, eps=eps, scale=scale)

    def const_spec(a):
        n = a.ndim
        return pl.BlockSpec(a.shape, lambda b, _n=n: (0,) * _n)

    return pl.pallas_call(
        kernel,
        out_shape=(
            jax.ShapeDtypeStruct((B, L, Do), x.dtype),
            jax.ShapeDtypeStruct((B, L, L), jnp.float32),
        ),
        grid=(nb,),
        in_specs=[pl.BlockSpec((bblk, L, E), lambda b: (b, 0, 0))]
                 + [const_spec(a) for a in weights],
        out_specs=(
            pl.BlockSpec((bblk, L, Do), lambda b: (b, 0, 0)),
            pl.BlockSpec((bblk, L, L), lambda b: (b, 0, 0)),
        ),
        compiler_params=pltpu.CompilerParams(
            dimension_semantics=("parallel",),
            vmem_limit_bytes=vmem_limit,
        ),
    )(x, wqkv, wo, w1, w2, vec)


def reference_block(x, params, *, heads=4, eps=1e-5):
    """Pure-JAX reference matching the PyTorch module (eval mode, exact GELU)."""
    B, L, E = x.shape
    D = E // heads
    qkv = x @ params["in_proj_w"].T + params["in_proj_b"]
    q, k, v = qkv[..., :E], qkv[..., E:2 * E], qkv[..., 2 * E:]

    def split(t):  # (B, L, E) -> (B, H, L, D)
        return t.reshape(B, L, heads, D).transpose(0, 2, 1, 3)

    qh, kh, vh = split(q), split(k), split(v)
    s = jnp.einsum("bhld,bhmd->bhlm", qh, kh) / math.sqrt(D)
    p = jax.nn.softmax(s, axis=-1)
    ctx = jnp.einsum("bhlm,bhmd->bhld", p, vh).transpose(0, 2, 1, 3).reshape(B, L, E)
    attn_out = ctx @ params["out_proj_w"].T + params["out_proj_b"]
    attn_w = jnp.mean(p, axis=1)                      # averaged over heads

    def ln(t, g, b):
        m = jnp.mean(t, -1, keepdims=True)
        va = jnp.mean(jnp.square(t - m), -1, keepdims=True)
        return (t - m) / jnp.sqrt(va + eps) * g + b

    h1 = ln(x + attn_out, params["ln1_g"], params["ln1_b"])
    ff = h1 @ params["lin1_w"].T + params["lin1_b"]
    ff = 0.5 * ff * (1.0 + jax.lax.erf(ff / math.sqrt(2.0)))
    ff = ff @ params["lin2_w"].T + params["lin2_b"]
    y = ln(ff, params["ln2_g"], params["ln2_b"])
    return y, attn_w


def make_params(key, dim_in, dim_out, dim_hidden):
    ks = jax.random.split(key, 8)
    s = 0.05
    return {
        "in_proj_w": s * jax.random.normal(ks[0], (3 * dim_in, dim_in), jnp.float32),
        "in_proj_b": s * jax.random.normal(ks[1], (3 * dim_in,), jnp.float32),
        "out_proj_w": s * jax.random.normal(ks[2], (dim_in, dim_in), jnp.float32),
        "out_proj_b": s * jax.random.normal(ks[3], (dim_in,), jnp.float32),
        "lin1_w": s * jax.random.normal(ks[4], (dim_hidden, dim_in), jnp.float32),
        "lin1_b": s * jax.random.normal(ks[5], (dim_hidden,), jnp.float32),
        "lin2_w": s * jax.random.normal(ks[6], (dim_out, dim_hidden), jnp.float32),
        "lin2_b": s * jax.random.normal(ks[7], (dim_out,), jnp.float32),
        "ln1_g": jnp.ones((dim_in,), jnp.float32) * 1.1,
        "ln1_b": jnp.full((dim_in,), 0.02, jnp.float32),
        "ln2_g": jnp.ones((dim_out,), jnp.float32) * 0.9,
        "ln2_b": jnp.full((dim_out,), -0.01, jnp.float32),
    }


if __name__ == "__main__":
    B, L = 2, 8
    dim_in, dim_out, dim_hidden, heads = 32, 32, 64, 4

    key = jax.random.PRNGKey(0)
    kx, kp = jax.random.split(key)
    x = jax.random.normal(kx, (B, L, dim_in), jnp.float32)
    params = make_params(kp, dim_in, dim_out, dim_hidden)

    y, attn = transformer_encoder_block(x, params, heads=heads, eps=1e-5)
    y = jax.block_until_ready(y)
    attn = jax.block_until_ready(attn)

    y_ref, attn_ref = reference_block(x, params, heads=heads, eps=1e-5)

    # bf16 MXU operands + approx reciprocal + tanh-GELU -> bf16-level tolerances.
    assert y.shape == (B, L, dim_out) and attn.shape == (B, L, L), "bad output shapes"
    assert jnp.all(jnp.isfinite(y)) and jnp.all(jnp.isfinite(attn)), "non-finite output"
    assert jnp.allclose(y, y_ref, atol=4e-2, rtol=4e-2), "output mismatch"
    assert jnp.allclose(attn, attn_ref, atol=5e-3, rtol=5e-3), "attn mismatch"
    assert jnp.allclose(jnp.sum(attn, axis=-1), 1.0, atol=1e-2), "attn rows not normalized"

    print("KERNEL_OK")
</pallas_src>

<mosaic_0001>
module attributes {stable_mosaic.version = 11 : i64} {
  func.func @transformer_block_kernel(%arg0: i32, %arg1: memref<2x8x32xf32, #tpu.memory_space<vmem>>, %arg2: memref<32x96xbf16, #tpu.memory_space<vmem>>, %arg3: memref<32x32xbf16, #tpu.memory_space<vmem>>, %arg4: memref<32x64xbf16, #tpu.memory_space<vmem>>, %arg5: memref<64x32xbf16, #tpu.memory_space<vmem>>, %arg6: memref<8x128xf32, #tpu.memory_space<vmem>>, %arg7: memref<2x8x32xf32, #tpu.memory_space<vmem>>, %arg8: memref<2x8x8xf32, #tpu.memory_space<vmem>>) attributes {dimension_semantics = [#tpu.dimension_semantics<parallel>], iteration_bounds = array<i64: 1>, scalar_prefetch = 0 : i64, scratch_operands = 0 : i64, tpu.core_type = #tpu.core_type<tc>, window_params = [{transform_indices = @transform_0, window_bounds = array<i64: 2, 8, 32>}, {pipeline_mode = #tpu.pipeline_mode<synchronous>, transform_indices = @transform_1, window_bounds = array<i64: 32, 96>}, {pipeline_mode = #tpu.pipeline_mode<synchronous>, transform_indices = @transform_2, window_bounds = array<i64: 32, 32>}, {pipeline_mode = #tpu.pipeline_mode<synchronous>, transform_indices = @transform_3, window_bounds = array<i64: 32, 64>}, {pipeline_mode = #tpu.pipeline_mode<synchronous>, transform_indices = @transform_4, window_bounds = array<i64: 64, 32>}, {pipeline_mode = #tpu.pipeline_mode<synchronous>, transform_indices = @transform_5, window_bounds = array<i64: 8, 128>}, {transform_indices = @transform_6, window_bounds = array<i64: 2, 8, 32>}, {transform_indices = @transform_7, window_bounds = array<i64: 2, 8, 8>}]} {
    %c0 = arith.constant 0 : index
    %c0_0 = arith.constant 0 : index
    %c0_1 = arith.constant 0 : index
    %0 = vector.load %arg1[%c0, %c0_0, %c0_1] : memref<2x8x32xf32, #tpu.memory_space<vmem>>, vector<2x8x32xf32>
    %1 = vector.shape_cast %0 : vector<2x8x32xf32> to vector<16x32xf32>
    %c0_2 = arith.constant 0 : index
    %c0_3 = arith.constant 0 : index
    %2 = vector.load %arg6[%c0_2, %c0_3] : memref<8x128xf32, #tpu.memory_space<vmem>>, vector<8x128xf32>
    %3 = vector.extract_strided_slice %2 {offsets = [0, 0], sizes = [1, 96], strides = [1, 1]} : vector<8x128xf32> to vector<1x96xf32>
    %4 = vector.shape_cast %3 : vector<1x96xf32> to vector<96xf32>
    %5 = vector.extract_strided_slice %2 {offsets = [1, 0], sizes = [1, 32], strides = [1, 1]} : vector<8x128xf32> to vector<1x32xf32>
    %6 = vector.shape_cast %5 : vector<1x32xf32> to vector<32xf32>
    %7 = vector.extract_strided_slice %2 {offsets = [2, 0], sizes = [1, 64], strides = [1, 1]} : vector<8x128xf32> to vector<1x64xf32>
    %8 = vector.shape_cast %7 : vector<1x64xf32> to vector<64xf32>
    %9 = vector.extract_strided_slice %2 {offsets = [3, 0], sizes = [1, 32], strides = [1, 1]} : vector<8x128xf32> to vector<1x32xf32>
    %10 = vector.shape_cast %9 : vector<1x32xf32> to vector<32xf32>
    %11 = vector.extract_strided_slice %2 {offsets = [4, 0], sizes = [1, 32], strides = [1, 1]} : vector<8x128xf32> to vector<1x32xf32>
    %12 = vector.shape_cast %11 : vector<1x32xf32> to vector<32xf32>
    %13 = vector.extract_strided_slice %2 {offsets = [5, 0], sizes = [1, 32], strides = [1, 1]} : vector<8x128xf32> to vector<1x32xf32>
    %14 = vector.shape_cast %13 : vector<1x32xf32> to vector<32xf32>
    %15 = vector.extract_strided_slice %2 {offsets = [6, 0], sizes = [1, 32], strides = [1, 1]} : vector<8x128xf32> to vector<1x32xf32>
    %16 = vector.shape_cast %15 : vector<1x32xf32> to vector<32xf32>
    %17 = vector.extract_strided_slice %2 {offsets = [7, 0], sizes = [1, 32], strides = [1, 1]} : vector<8x128xf32> to vector<1x32xf32>
    %18 = vector.shape_cast %17 : vector<1x32xf32> to vector<32xf32>
    %19 = arith.truncf %1 : vector<16x32xf32> to vector<16x32xbf16>
    %c0_4 = arith.constant 0 : index
    %c0_5 = arith.constant 0 : index
    %20 = vector.load %arg2[%c0_4, %c0_5] : memref<32x96xbf16, #tpu.memory_space<vmem>>, vector<32x96xbf16>
    %cst = arith.constant dense<0.000000e+00> : vector<16x96xf32>
    %21 = tpu.matmul %19, %20, %cst {dimension_numbers = #tpu.dot_dimension_numbers<[1], [0], [0], [1], [0, 0, 1, 1], [], []>} : vector<16x32xbf16>, vector<32x96xbf16>, vector<16x96xf32> -> vector<16x96xf32>
    %22 = vector.shape_cast %4 : vector<96xf32> to vector<1x96xf32>
    %23 = vector.broadcast %22 : vector<1x96xf32> to vector<16x96xf32>
    %24 = arith.addf %21, %23 : vector<16x96xf32>
    %25 = vector.extract_strided_slice %24 {offsets = [0, 0], sizes = [16, 32], strides = [1, 1]} : vector<16x96xf32> to vector<16x32xf32>
    %cst_6 = arith.constant 0.353553385 : f32
    %26 = vector.broadcast %cst_6 : f32 to vector<16x32xf32>
    %27 = arith.mulf %25, %26 : vector<16x32xf32>
    %28 = vector.extract_strided_slice %27 {offsets = [0, 0], sizes = [16, 8], strides = [1, 1]} : vector<16x32xf32> to vector<16x8xf32>
    %29 = vector.shape_cast %28 : vector<16x8xf32> to vector<2x1x8x8xf32>
    %30 = vector.extract_strided_slice %27 {offsets = [0, 8], sizes = [16, 8], strides = [1, 1]} : vector<16x32xf32> to vector<16x8xf32>
    %31 = vector.shape_cast %30 : vector<16x8xf32> to vector<2x1x8x8xf32>
    %32 = vector.extract_strided_slice %27 {offsets = [0, 16], sizes = [16, 8], strides = [1, 1]} : vector<16x32xf32> to vector<16x8xf32>
    %33 = vector.shape_cast %32 : vector<16x8xf32> to vector<2x1x8x8xf32>
    %34 = vector.extract_strided_slice %27 {offsets = [0, 24], sizes = [16, 8], strides = [1, 1]} : vector<16x32xf32> to vector<16x8xf32>
    %35 = vector.shape_cast %34 : vector<16x8xf32> to vector<2x1x8x8xf32>
    %36 = tpu.concatenate %29, %31, %33, %35 in 1 : vector<2x1x8x8xf32>, vector<2x1x8x8xf32>, vector<2x1x8x8xf32>, vector<2x1x8x8xf32> -> vector<2x4x8x8xf32>
    %37 = vector.shape_cast %36 : vector<2x4x8x8xf32> to vector<8x8x8xf32>
    %38 = arith.truncf %37 : vector<8x8x8xf32> to vector<8x8x8xbf16>
    %39 = vector.extract_strided_slice %24 {offsets = [0, 32], sizes = [16, 32], strides = [1, 1]} : vector<16x96xf32> to vector<16x32xf32>
    %40 = vector.extract_strided_slice %39 {offsets = [0, 0], sizes = [16, 8], strides = [1, 1]} : vector<16x32xf32> to vector<16x8xf32>
    %41 = vector.shape_cast %40 : vector<16x8xf32> to vector<2x1x8x8xf32>
    %42 = vector.extract_strided_slice %39 {offsets = [0, 8], sizes = [16, 8], strides = [1, 1]} : vector<16x32xf32> to vector<16x8xf32>
    %43 = vector.shape_cast %42 : vector<16x8xf32> to vector<2x1x8x8xf32>
    %44 = vector.extract_strided_slice %39 {offsets = [0, 16], sizes = [16, 8], strides = [1, 1]} : vector<16x32xf32> to vector<16x8xf32>
    %45 = vector.shape_cast %44 : vector<16x8xf32> to vector<2x1x8x8xf32>
    %46 = vector.extract_strided_slice %39 {offsets = [0, 24], sizes = [16, 8], strides = [1, 1]} : vector<16x32xf32> to vector<16x8xf32>
    %47 = vector.shape_cast %46 : vector<16x8xf32> to vector<2x1x8x8xf32>
    %48 = tpu.concatenate %41, %43, %45, %47 in 1 : vector<2x1x8x8xf32>, vector<2x1x8x8xf32>, vector<2x1x8x8xf32>, vector<2x1x8x8xf32> -> vector<2x4x8x8xf32>
    %49 = vector.shape_cast %48 : vector<2x4x8x8xf32> to vector<8x8x8xf32>
    %50 = arith.truncf %49 : vector<8x8x8xf32> to vector<8x8x8xbf16>
    %51 = vector.extract_strided_slice %24 {offsets = [0, 64], sizes = [16, 32], strides = [1, 1]} : vector<16x96xf32> to vector<16x32xf32>
    %52 = vector.extract_strided_slice %51 {offsets = [0, 0], sizes = [16, 8], strides = [1, 1]} : vector<16x32xf32> to vector<16x8xf32>
    %53 = vector.shape_cast %52 : vector<16x8xf32> to vector<2x1x8x8xf32>
    %54 = vector.extract_strided_slice %51 {offsets = [0, 8], sizes = [16, 8], strides = [1, 1]} : vector<16x32xf32> to vector<16x8xf32>
    %55 = vector.shape_cast %54 : vector<16x8xf32> to vector<2x1x8x8xf32>
    %56 = vector.extract_strided_slice %51 {offsets = [0, 16], sizes = [16, 8], strides = [1, 1]} : vector<16x32xf32> to vector<16x8xf32>
    %57 = vector.shape_cast %56 : vector<16x8xf32> to vector<2x1x8x8xf32>
    %58 = vector.extract_strided_slice %51 {offsets = [0, 24], sizes = [16, 8], strides = [1, 1]} : vector<16x32xf32> to vector<16x8xf32>
    %59 = vector.shape_cast %58 : vector<16x8xf32> to vector<2x1x8x8xf32>
    %60 = tpu.concatenate %53, %55, %57, %59 in 1 : vector<2x1x8x8xf32>, vector<2x1x8x8xf32>, vector<2x1x8x8xf32>, vector<2x1x8x8xf32> -> vector<2x4x8x8xf32>
    %61 = vector.shape_cast %60 : vector<2x4x8x8xf32> to vector<8x8x8xf32>
    %62 = arith.truncf %61 : vector<8x8x8xf32> to vector<8x8x8xbf16>
    "tpu.trace_start"() <{level = 10 : i32, message = "bld,bmd->blm"}> : () -> ()
    %cst_7 = arith.constant dense<0.000000e+00> : vector<8x8x8xf32>
    %63 = tpu.matmul %38, %50, %cst_7 {dimension_numbers = #tpu.dot_dimension_numbers<[2], [2], [1], [1], [0, 0, 0, 1, 1, 1], [0], [0]>} : vector<8x8x8xbf16>, vector<8x8x8xbf16>, vector<8x8x8xf32> -> vector<8x8x8xf32>
    "tpu.trace_stop"() : () -> ()
    %cst_8 = arith.constant dense<0xFF800000> : vector<8x8xf32>
    %64 = vector.multi_reduction <maximumf>, %63, %cst_8 [2] : vector<8x8x8xf32> to vector<8x8xf32>
    %65 = vector.shape_cast %64 : vector<8x8xf32> to vector<8x8x1xf32>
    %66 = vector.broadcast %65 : vector<8x8x1xf32> to vector<8x8x8xf32>
    %67 = arith.subf %63, %66 : vector<8x8x8xf32>
    %68 = math.exp %67 : vector<8x8x8xf32>
    %cst_9 = arith.constant dense<0.000000e+00> : vector<8x8xf32>
    %69 = vector.multi_reduction <add>, %68, %cst_9 [2] : vector<8x8x8xf32> to vector<8x8xf32>
    %70 = vector.shape_cast %69 : vector<8x8xf32> to vector<8x8x1xf32>
    %71 = tpu.reciprocal %70 {approx = true} : vector<8x8x1xf32> -> vector<8x8x1xf32>
    %72 = vector.broadcast %71 : vector<8x8x1xf32> to vector<8x8x8xf32>
    %73 = arith.mulf %68, %72 : vector<8x8x8xf32>
    %74 = vector.shape_cast %73 : vector<8x8x8xf32> to vector<2x4x8x8xf32>
    %cst_10 = arith.constant dense<0.000000e+00> : vector<2x8x8xf32>
    %75 = vector.multi_reduction <add>, %74, %cst_10 [1] : vector<2x4x8x8xf32> to vector<2x8x8xf32>
    %cst_11 = arith.constant 2.500000e-01 : f32
    %76 = vector.broadcast %cst_11 : f32 to vector<2x8x8xf32>
    %77 = arith.mulf %75, %76 : vector<2x8x8xf32>
    %c0_12 = arith.constant 0 : index
    %c0_13 = arith.constant 0 : index
    %c0_14 = arith.constant 0 : index
    %78 = vector.load %arg8[%c0_12, %c0_13, %c0_14] : memref<2x8x8xf32, #tpu.memory_space<vmem>>, vector<2x8x8xf32>
    tpu.vector_store %arg8[%c0_12, %c0_13, %c0_14], %77 {strides = array<i32>} : memref<2x8x8xf32, #tpu.memory_space<vmem>>, vector<2x8x8xf32>,
    %79 = arith.truncf %73 : vector<8x8x8xf32> to vector<8x8x8xbf16>
    "tpu.trace_start"() <{level = 10 : i32, message = "blm,bmd->bld"}> : () -> ()
    %cst_15 = arith.constant dense<0.000000e+00> : vector<8x8x8xf32>
    %80 = tpu.matmul %79, %62, %cst_15 {dimension_numbers = #tpu.dot_dimension_numbers<[2], [1], [1], [2], [0, 0, 0, 1, 1, 2], [0], [0]>} : vector<8x8x8xbf16>, vector<8x8x8xbf16>, vector<8x8x8xf32> -> vector<8x8x8xf32>
    "tpu.trace_stop"() : () -> ()
    %81 = vector.shape_cast %80 : vector<8x8x8xf32> to vector<2x4x8x8xf32>
    %82 = vector.extract_strided_slice %81 {offsets = [0, 0, 0, 0], sizes = [2, 1, 8, 8], strides = [1, 1, 1, 1]} : vector<2x4x8x8xf32> to vector<2x1x8x8xf32>
    %83 = vector.shape_cast %82 : vector<2x1x8x8xf32> to vector<2x8x8xf32>
    %84 = vector.extract_strided_slice %81 {offsets = [0, 1, 0, 0], sizes = [2, 1, 8, 8], strides = [1, 1, 1, 1]} : vector<2x4x8x8xf32> to vector<2x1x8x8xf32>
    %85 = vector.shape_cast %84 : vector<2x1x8x8xf32> to vector<2x8x8xf32>
    %86 = vector.extract_strided_slice %81 {offsets = [0, 2, 0, 0], sizes = [2, 1, 8, 8], strides = [1, 1, 1, 1]} : vector<2x4x8x8xf32> to vector<2x1x8x8xf32>
    %87 = vector.shape_cast %86 : vector<2x1x8x8xf32> to vector<2x8x8xf32>
    %88 = vector.extract_strided_slice %81 {offsets = [0, 3, 0, 0], sizes = [2, 1, 8, 8], strides = [1, 1, 1, 1]} : vector<2x4x8x8xf32> to vector<2x1x8x8xf32>
    %89 = vector.shape_cast %88 : vector<2x1x8x8xf32> to vector<2x8x8xf32>
    %90 = tpu.concatenate %83, %85, %87, %89 in 2 : vector<2x8x8xf32>, vector<2x8x8xf32>, vector<2x8x8xf32>, vector<2x8x8xf32> -> vector<2x8x32xf32>
    %91 = vector.shape_cast %90 : vector<2x8x32xf32> to vector<16x32xf32>
    %92 = arith.truncf %91 : vector<16x32xf32> to vector<16x32xbf16>
    %c0_16 = arith.constant 0 : index
    %c0_17 = arith.constant 0 : index
    %93 = vector.load %arg3[%c0_16, %c0_17] : memref<32x32xbf16, #tpu.memory_space<vmem>>, vector<32x32xbf16>
    %cst_18 = arith.constant dense<0.000000e+00> : vector<16x32xf32>
    %94 = tpu.matmul %92, %93, %cst_18 {dimension_numbers = #tpu.dot_dimension_numbers<[1], [0], [0], [1], [0, 0, 1, 1], [], []>} : vector<16x32xbf16>, vector<32x32xbf16>, vector<16x32xf32> -> vector<16x32xf32>
    %95 = vector.shape_cast %6 : vector<32xf32> to vector<1x32xf32>
    %96 = vector.broadcast %95 : vector<1x32xf32> to vector<16x32xf32>
    %97 = arith.addf %94, %96 : vector<16x32xf32>
    %98 = arith.addf %1, %97 : vector<16x32xf32>
    %cst_19 = arith.constant dense<0.000000e+00> : vector<16xf32>
    %99 = vector.multi_reduction <add>, %98, %cst_19 [1] : vector<16x32xf32> to vector<16xf32>
    %100 = vector.shape_cast %99 : vector<16xf32> to vector<16x1xf32>
    %cst_20 = arith.constant 3.200000e+01 : f32
    %101 = vector.broadcast %cst_20 : f32 to vector<16x1xf32>
    %102 = arith.divf %100, %101 : vector<16x1xf32>
    %103 = vector.broadcast %102 : vector<16x1xf32> to vector<16x32xf32>
    %104 = arith.subf %98, %103 : vector<16x32xf32>
    %105 = arith.mulf %104, %104 : vector<16x32xf32>
    %cst_21 = arith.constant dense<0.000000e+00> : vector<16xf32>
    %106 = vector.multi_reduction <add>, %105, %cst_21 [1] : vector<16x32xf32> to vector<16xf32>
    %107 = vector.shape_cast %106 : vector<16xf32> to vector<16x1xf32>
    %cst_22 = arith.constant 3.200000e+01 : f32
    %108 = vector.broadcast %cst_22 : f32 to vector<16x1xf32>
    %109 = arith.divf %107, %108 : vector<16x1xf32>
    %110 = vector.broadcast %102 : vector<16x1xf32> to vector<16x32xf32>
    %111 = arith.subf %98, %110 : vector<16x32xf32>
    %cst_23 = arith.constant 9.99999974E-6 : f32
    %112 = vector.broadcast %cst_23 : f32 to vector<16x1xf32>
    %113 = arith.addf %109, %112 : vector<16x1xf32>
    %114 = math.rsqrt %113 : vector<16x1xf32>
    %115 = vector.broadcast %114 : vector<16x1xf32> to vector<16x32xf32>
    %116 = arith.mulf %111, %115 : vector<16x32xf32>
    %117 = vector.shape_cast %12 : vector<32xf32> to vector<1x32xf32>
    %118 = vector.broadcast %117 : vector<1x32xf32> to vector<16x32xf32>
    %119 = arith.mulf %116, %118 : vector<16x32xf32>
    %120 = vector.shape_cast %14 : vector<32xf32> to vector<1x32xf32>
    %121 = vector.broadcast %120 : vector<1x32xf32> to vector<16x32xf32>
    %122 = arith.addf %119, %121 : vector<16x32xf32>
    %123 = arith.truncf %122 : vector<16x32xf32> to vector<16x32xbf16>
    %c0_24 = arith.constant 0 : index
    %c0_25 = arith.constant 0 : index
    %124 = vector.load %arg4[%c0_24, %c0_25] : memref<32x64xbf16, #tpu.memory_space<vmem>>, vector<32x64xbf16>
    %cst_26 = arith.constant dense<0.000000e+00> : vector<16x64xf32>
    %125 = tpu.matmul %123, %124, %cst_26 {dimension_numbers = #tpu.dot_dimension_numbers<[1], [0], [0], [1], [0, 0, 1, 1], [], []>} : vector<16x32xbf16>, vector<32x64xbf16>, vector<16x64xf32> -> vector<16x64xf32>
    %126 = vector.shape_cast %8 : vector<64xf32> to vector<1x64xf32>
    %127 = vector.broadcast %126 : vector<1x64xf32> to vector<16x64xf32>
    %128 = arith.addf %125, %127 : vector<16x64xf32>
    %cst_27 = arith.constant 5.000000e-01 : f32
    %129 = vector.broadcast %cst_27 : f32 to vector<16x64xf32>
    %130 = arith.mulf %129, %128 : vector<16x64xf32>
    %cst_28 = arith.constant 4.471500e-02 : f32
    %131 = vector.broadcast %cst_28 : f32 to vector<16x64xf32>
    %132 = arith.mulf %131, %128 : vector<16x64xf32>
    %133 = arith.mulf %132, %128 : vector<16x64xf32>
    %134 = arith.mulf %133, %128 : vector<16x64xf32>
    %135 = arith.addf %128, %134 : vector<16x64xf32>
    %cst_29 = arith.constant 0.797884583 : f32
    %136 = vector.broadcast %cst_29 : f32 to vector<16x64xf32>
    %137 = arith.mulf %136, %135 : vector<16x64xf32>
    %138 = math.tanh %137 : vector<16x64xf32>
    %cst_30 = arith.constant 1.000000e+00 : f32
    %139 = vector.broadcast %cst_30 : f32 to vector<16x64xf32>
    %140 = arith.addf %139, %138 : vector<16x64xf32>
    %141 = arith.mulf %130, %140 : vector<16x64xf32>
    %142 = arith.truncf %141 : vector<16x64xf32> to vector<16x64xbf16>
    %c0_31 = arith.constant 0 : index
    %c0_32 = arith.constant 0 : index
    %143 = vector.load %arg5[%c0_31, %c0_32] : memref<64x32xbf16, #tpu.memory_space<vmem>>, vector<64x32xbf16>
    %cst_33 = arith.constant dense<0.000000e+00> : vector<16x32xf32>
    %144 = tpu.matmul %142, %143, %cst_33 {dimension_numbers = #tpu.dot_dimension_numbers<[1], [0], [0], [1], [0, 0, 1, 1], [], []>} : vector<16x64xbf16>, vector<64x32xbf16>, vector<16x32xf32> -> vector<16x32xf32>
    %145 = vector.shape_cast %10 : vector<32xf32> to vector<1x32xf32>
    %146 = vector.broadcast %145 : vector<1x32xf32> to vector<16x32xf32>
    %147 = arith.addf %144, %146 : vector<16x32xf32>
    %cst_34 = arith.constant dense<0.000000e+00> : vector<16xf32>
    %148 = vector.multi_reduction <add>, %147, %cst_34 [1] : vector<16x32xf32> to vector<16xf32>
    %149 = vector.shape_cast %148 : vector<16xf32> to vector<16x1xf32>
    %cst_35 = arith.constant 3.200000e+01 : f32
    %150 = vector.broadcast %cst_35 : f32 to vector<16x1xf32>
    %151 = arith.divf %149, %150 : vector<16x1xf32>
    %152 = vector.broadcast %151 : vector<16x1xf32> to vector<16x32xf32>
    %153 = arith.subf %147, %152 : vector<16x32xf32>
    %154 = arith.mulf %153, %153 : vector<16x32xf32>
    %cst_36 = arith.constant dense<0.000000e+00> : vector<16xf32>
    %155 = vector.multi_reduction <add>, %154, %cst_36 [1] : vector<16x32xf32> to vector<16xf32>
    %156 = vector.shape_cast %155 : vector<16xf32> to vector<16x1xf32>
    %cst_37 = arith.constant 3.200000e+01 : f32
    %157 = vector.broadcast %cst_37 : f32 to vector<16x1xf32>
    %158 = arith.divf %156, %157 : vector<16x1xf32>
    %159 = vector.broadcast %151 : vector<16x1xf32> to vector<16x32xf32>
    %160 = arith.subf %147, %159 : vector<16x32xf32>
    %cst_38 = arith.constant 9.99999974E-6 : f32
    %161 = vector.broadcast %cst_38 : f32 to vector<16x1xf32>
    %162 = arith.addf %158, %161 : vector<16x1xf32>
    %163 = math.rsqrt %162 : vector<16x1xf32>
    %164 = vector.broadcast %163 : vector<16x1xf32> to vector<16x32xf32>
    %165 = arith.mulf %160, %164 : vector<16x32xf32>
    %166 = vector.shape_cast %16 : vector<32xf32> to vector<1x32xf32>
    %167 = vector.broadcast %166 : vector<1x32xf32> to vector<16x32xf32>
    %168 = arith.mulf %165, %167 : vector<16x32xf32>
    %169 = vector.shape_cast %18 : vector<32xf32> to vector<1x32xf32>
    %170 = vector.broadcast %169 : vector<1x32xf32> to vector<16x32xf32>
    %171 = arith.addf %168, %170 : vector<16x32xf32>
    %172 = vector.shape_cast %171 : vector<16x32xf32> to vector<2x8x32xf32>
    %c0_39 = arith.constant 0 : index
    %c0_40 = arith.constant 0 : index
    %c0_41 = arith.constant 0 : index
    %173 = vector.load %arg7[%c0_39, %c0_40, %c0_41] : memref<2x8x32xf32, #tpu.memory_space<vmem>>, vector<2x8x32xf32>
    tpu.vector_store %arg7[%c0_39, %c0_40, %c0_41], %172 {strides = array<i32>} : memref<2x8x32xf32, #tpu.memory_space<vmem>>, vector<2x8x32xf32>,
    return
  }
  func.func @transform_0(%arg0: i32) -> (i32, i32, i32) {
    %c0_i32 = arith.constant 0 : i32
    %c0_i32_0 = arith.constant 0 : i32
    %c0_i32_1 = arith.constant 0 : i32
    return %arg0, %c0_i32, %c0_i32_0 : i32, i32, i32
  }
  func.func @transform_1(%arg0: i32) -> (i32, i32) {
    %c0_i32 = arith.constant 0 : i32
    %c0_i32_0 = arith.constant 0 : i32
    %c0_i32_1 = arith.constant 0 : i32
    return %c0_i32, %c0_i32_0 : i32, i32
  }
  func.func @transform_2(%arg0: i32) -> (i32, i32) {
    %c0_i32 = arith.constant 0 : i32
    %c0_i32_0 = arith.constant 0 : i32
    %c0_i32_1 = arith.constant 0 : i32
    return %c0_i32, %c0_i32_0 : i32, i32
  }
  func.func @transform_3(%arg0: i32) -> (i32, i32) {
    %c0_i32 = arith.constant 0 : i32
    %c0_i32_0 = arith.constant 0 : i32
    %c0_i32_1 = arith.constant 0 : i32
    return %c0_i32, %c0_i32_0 : i32, i32
  }
  func.func @transform_4(%arg0: i32) -> (i32, i32) {
    %c0_i32 = arith.constant 0 : i32
    %c0_i32_0 = arith.constant 0 : i32
    %c0_i32_1 = arith.constant 0 : i32
    return %c0_i32, %c0_i32_0 : i32, i32
  }
  func.func @transform_5(%arg0: i32) -> (i32, i32) {
    %c0_i32 = arith.constant 0 : i32
    %c0_i32_0 = arith.constant 0 : i32
    %c0_i32_1 = arith.constant 0 : i32
    return %c0_i32, %c0_i32_0 : i32, i32
  }
  func.func @transform_6(%arg0: i32) -> (i32, i32, i32) {
    %c0_i32 = arith.constant 0 : i32
    %c0_i32_0 = arith.constant 0 : i32
    %c0_i32_1 = arith.constant 0 : i32
    return %arg0, %c0_i32, %c0_i32_0 : i32, i32, i32
  }
  func.func @transform_7(%arg0: i32) -> (i32, i32, i32) {
    %c0_i32 = arith.constant 0 : i32
    %c0_i32_0 = arith.constant 0 : i32
    %c0_i32_1 = arith.constant 0 : i32
    return %arg0, %c0_i32, %c0_i32_0 : i32, i32, i32
  }
}

</mosaic_0001>

<llo_original>
// kernel: tpu_custom_call.1
$region0: #{tpu_custom_call.1}
  #allocation0 [shape = 'u32[]', space=smem, size = 0x4, offset = 0x4, fixed_abs, tag = 'smem constant byte address 0x4 - core index']
  #allocation1 [shape = 'u32[144,128]{1,0:T(1,128)}', space=vmem, size = 0x12000, scoped, tag = 'internal scratch']
  %s0 = inlined_call_operand.vmem [shape: f32[2,8,32], index: 0, kind: input, shape index: {}]
  %s1 = inlined_call_operand.vmem [shape: bf16[32,96], index: 1, kind: input, shape index: {}]
  %s2 = inlined_call_operand.vmem [shape: bf16[32,32], index: 2, kind: input, shape index: {}]
  %s3 = inlined_call_operand.hbm [shape: bf16[32,64], index: 3, kind: input, shape index: {}]
  %s4 = inlined_call_operand.vmem [shape: bf16[64,32], index: 4, kind: input, shape index: {}]
  %s5 = inlined_call_operand.vmem [shape: f32[8,128], index: 5, kind: input, shape index: {}]
  %s6 = inlined_call_operand.hbm [shape: f32[2,8,32], index: 6, kind: output, shape index: {0}]
  %s7 = inlined_call_operand.hbm [shape: f32[2,8,8], index: 7, kind: output, shape index: {1}]
  %8 = xla_tuple %s6, %s7
  %s9 = sld [smem:[#allocation0]]
  $region46: #{tpu_custom_call.1} parent=0
    _
  %s11 = ssub.s32 1, %s9
  %s12 = scalar_select 0, %s11, %s9
  $region1: #{tpu_custom_call.1} parent=0
    #allocation2 [shape = 'u8[8192]{0}', space=vmem, size = 0x2000, scoped, tag = 'input window, operand 3, single buffered']
    #allocation3 [shape = 's32[1]{0}', space=sflag, size = 0x4, scoped, tag = 'scoped memory for tpu_custom_call.1']
    #allocation4 [shape = 's32[1]{0}', space=sflag, size = 0x4, scoped, tag = 'scoped memory for tpu_custom_call.1']
    #allocation5 [shape = 'u8[8192]{0}', space=vmem, size = 0x2000, scoped, tag = 'output window, operand 0, single buffered']
    #allocation6 [shape = 'u8[8192]{0}', space=vmem, size = 0x2000, scoped, tag = 'output window, operand 1, single buffered']
    #allocation7 [shape = 's32[1]{0}', space=sflag, size = 0x4, scoped, tag = 'scoped memory for tpu_custom_call.1']
    %13 = vsyncpa [#allocation3], 0
    %14 = vsyncpa [#allocation4], 0
    %15 = vsyncpa [#allocation7], 0
    // Predicated region
    $region2: #{tpu_custom_call.1} parent=1 // pred_check
      _
    $region3: #{tpu_custom_call.1} parent=1 // pred_check_branch
      %17 = sbr.rel (0) target = $region5
    $region4: #{tpu_custom_call.1} parent=1 // pred_region
      _
    $region5: #{tpu_custom_call.1} parent=1 // pred_fallthru
      _
    // Predicated region
    $region6: #{tpu_custom_call.1} parent=1 // pred_check
      _
    $region7: #{tpu_custom_call.1} parent=1 // pred_check_branch
      %19 = sbr.rel (0) target = $region9
    $region8: #{tpu_custom_call.1} parent=1 // pred_region
      _
    $region9: #{tpu_custom_call.1} parent=1 // pred_fallthru
      _
    // Predicated region
    $region10: #{tpu_custom_call.1} parent=1 // pred_check
      _
    $region11: #{tpu_custom_call.1} parent=1 // pred_check_branch
      %21 = sbr.rel (0) target = $region13
    $region12: #{tpu_custom_call.1} parent=1 // pred_region
      _
    $region13: #{tpu_custom_call.1} parent=1 // pred_fallthru
      _
    // Predicated region
    $region14: #{tpu_custom_call.1} parent=1 // pred_check
      _
    $region15: #{tpu_custom_call.1} parent=1 // pred_check_branch
      %23 = sbr.rel (0) target = $region17
    $region16: #{tpu_custom_call.1} parent=1 // pred_region
      %s25 = ssub.s32 256, 256
      %26 = vsyncadd [#allocation3], %s25
      %s27 = sshll.u32 [#allocation2], 4
      %s28 = int_to_ptr.vmem [resolvable:$true] %s27
      %33 = dma.hbm_to_vmem [thread:$0]  %s3, 256, %s28, [#allocation3], 64, 64, 4
    $region17: #{tpu_custom_call.1} parent=1 // pred_fallthru
      _
    // Predicated region
    $region18: #{tpu_custom_call.1} parent=1 // pred_check
      _
    $region19: #{tpu_custom_call.1} parent=1 // pred_check_branch
      %35 = sbr.rel (0) target = $region21
    $region20: #{tpu_custom_call.1} parent=1 // pred_region
      _
    $region21: #{tpu_custom_call.1} parent=1 // pred_fallthru
      _
    // Predicated region
    $region22: #{tpu_custom_call.1} parent=1 // pred_check
      _
    $region23: #{tpu_custom_call.1} parent=1 // pred_check_branch
      %37 = sbr.rel (0) target = $region25
    $region24: #{tpu_custom_call.1} parent=1 // pred_region
      _
    $region25: #{tpu_custom_call.1} parent=1 // pred_fallthru
      _
    // Predicated region
    $region26: #{tpu_custom_call.1} parent=1 // pred_check
      _
    $region27: #{tpu_custom_call.1} parent=1 // pred_check_branch
      %39 = sbr.rel (0) target = $region29
    $region28: #{tpu_custom_call.1} parent=1 // pred_region
      %40 = dma.done [#allocation3], 256
    $region29: #{tpu_custom_call.1} parent=1 // pred_fallthru
      _
    %v42 = vld [vmem:[%s0] sm:$0xff]
    %v43 = vld [vmem:[%s0 + $0x8] sm:$0xff]
    %v44 = vld [vmem:[%s5] sm:$0xff]
    %v45 = vpack.c.bf16 %v43, %v42
    %v46 = vld [vmem:[%s1] sm:$0xf]
    %v47 = vld [vmem:[%s1 + $0x4] sm:$0xf]
    %v48 = vld [vmem:[%s1 + $0x8] sm:$0xf]
    %v49 = vld [vmem:[%s1 + $0xc] sm:$0xf]
    %v50 = vlaneseq
    %v51 = vshrl.u32 %v50, 7
    %v52 = vsub.s32 0, %v51
    %v53 = vrot.slane %v44, %v52
    %v58 = vunpack.c.l.b16 %v46
    %v59 = vunpack.c.l.b16 %v47
    %v60 = vunpack.c.l.b16 %v48
    %v61 = vunpack.c.l.b16 %v49
    %v62 = vpack.c.b16 %v59, %v58
    %v63 = vpack.c.b16 %v61, %v60
    %vm66 = vcmask 261120
    %v68 = vsel %vm66, %v45, 0
    %70 = vmatprep.subr.bf16.mxu0 0
    %71 = vmatpush1.bf16.msra.mxu0 %v62
    %72 = vmatprep.subr.bf16.mxu0 0
    %73 = vmatpush1.bf16.msra.mxu0 %v63
    %74 = vmatprep.subr.bf16.mxu0 0
    %75 = vmatpush1.bf16.msra.mxu0 0
    %76 = vmatprep.subr.bf16.mxu0 0
    %77 = vmatpush1.bf16.msra.mxu0 0
    %78 = vmatprep.subr.bf16.mxu0 0
    %79 = vmatpush1.bf16.msra.mxu0 0
    %80 = vmatprep.subr.bf16.mxu0 0
    %81 = vmatpush1.bf16.msra.mxu0 0
    %82 = vmatprep.subr.bf16.mxu0 0
    %83 = vmatpush1.bf16.msra.mxu0 0
    %84 = vmatprep.subr.bf16.mxu0 0
    %85 = vmatpush1.bf16.msra.mxu0 0
    %86 = vmatprep.subr.bf16.mxu0 0
    %87 = vmatpush1.bf16.msra.mxu0 0
    %88 = vmatprep.subr.bf16.mxu0 0
    %89 = vmatpush1.bf16.msra.mxu0 0
    %90 = vmatprep.subr.bf16.mxu0 0
    %91 = vmatpush1.bf16.msra.mxu0 0
    %92 = vmatprep.subr.bf16.mxu0 0
    %93 = vmatpush1.bf16.msra.mxu0 0
    %94 = vmatprep.subr.bf16.mxu0 0
    %95 = vmatpush1.bf16.msra.mxu0 0
    %96 = vmatprep.subr.bf16.mxu0 0
    %97 = vmatpush1.bf16.msra.mxu0 0
    %98 = vmatprep.subr.bf16.mxu0 0
    %99 = vmatpush1.bf16.msra.mxu0 0
    %100 = vmatprep.subr.bf16.mxu0 0
    %101 = vmatpush1.bf16.msra.mxu0 0
    %102 = vmatprep.mubr.bf16.mxu0 0
    %103 = vmatmul.mubr.bf16.gmra.mrb[0].mxu0 %v68
    %v104 = vpop.f32.mrb[0].mxu0
    %v105 = vadd.f32 %v53, %v104
    %v106 = vpop.f32.mrb[0].mxu0
    %v107 = vpop.f32.mrb[0].mxu0
    %v108 = vadd.f32 %v53, %v107
    %v109 = vpop.f32.mrb[0].mxu0
    %110 = vdwg.mxu0
    %v111 = vmul.f32 %v105, 0.35355338
    %v112 = vmul.f32 %v108, 0.35355338
    %115 = vrot.lane.b32.xlu0 %v111, 120
    %v116 = vpop.permute.xlu0 %115
    %117 = vrot.lane.b32.xlu0 %v112, 120
    %v118 = vpop.permute.xlu0 %117
    %121 = vrot.lane.b32.xlu0 %v111, 112
    %v122 = vpop.permute.xlu0 %121
    %123 = vrot.lane.b32.xlu0 %v112, 112
    %v124 = vpop.permute.xlu0 %123
    %127 = vrot.lane.b32.xlu0 %v111, 104
    %v128 = vpop.permute.xlu0 %127
    %129 = vrot.lane.b32.xlu0 %v112, 104
    %v130 = vpop.permute.xlu0 %129
    %v133 = vpack.c.bf16 %v111, %v111
    %v134 = vpack.c.bf16 %v116, %v116
    %v135 = vpack.c.bf16 %v122, %v122
    %v136 = vpack.c.bf16 %v128, %v128
    %v137 = vpack.c.bf16 %v112, %v112
    %v138 = vpack.c.bf16 %v118, %v118
    %v139 = vpack.c.bf16 %v124, %v124
    %v140 = vpack.c.bf16 %v130, %v130
    %143 = vrot.lane.b32.xlu0 %v105, 120
    %v144 = vpop.permute.xlu0 %143
    %145 = vrot.lane.b32.xlu0 %v108, 120
    %v146 = vpop.permute.xlu0 %145
    %149 = vrot.lane.b32.xlu0 %v105, 112
    %v150 = vpop.permute.xlu0 %149
    %151 = vrot.lane.b32.xlu0 %v108, 112
    %v152 = vpop.permute.xlu0 %151
    %155 = vrot.lane.b32.xlu0 %v105, 104
    %v156 = vpop.permute.xlu0 %155
    %157 = vrot.lane.b32.xlu0 %v108, 104
    %v158 = vpop.permute.xlu0 %157
    %v161 = vpack.c.bf16 %v105, %v105
    %v162 = vpack.c.bf16 %v144, %v144
    %v163 = vpack.c.bf16 %v150, %v150
    %v164 = vpack.c.bf16 %v156, %v156
    %v165 = vpack.c.bf16 %v108, %v108
    %v166 = vpack.c.bf16 %v146, %v146
    %v167 = vpack.c.bf16 %v152, %v152
    %v168 = vpack.c.bf16 %v158, %v158
    %170 = vrot.lane.b32.xlu0 %v161, 96
    %v171 = vpop.permute.xlu0 %170
    %vm172 = vcmask 64512
    %v174 = vsel %vm172, %v133, 0
    %v177 = vsel %vm172, %v171, 0
    %179 = vmatprep.subr.bf16.mxu0 0
    %180 = vmatpush1.bf16.xpose.msra.mxu0 %v177
    %181 = vmatprep.subr.bf16.mxu0 0
    %182 = vmatpush1.bf16.xpose.msra.mxu0 0
    %183 = vmatprep.subr.bf16.mxu0 0
    %184 = vmatpush1.bf16.xpose.msra.mxu0 0
    %185 = vmatprep.subr.bf16.mxu0 0
    %186 = vmatpush1.bf16.xpose.msra.mxu0 0
    %187 = vmatprep.subr.bf16.mxu0 0
    %188 = vmatpush1.bf16.xpose.msra.mxu0 0
    %189 = vmatprep.subr.bf16.mxu0 0
    %190 = vmatpush1.bf16.xpose.msra.mxu0 0
    %191 = vmatprep.subr.bf16.mxu0 0
    %192 = vmatpush1.bf16.xpose.msra.mxu0 0
    %193 = vmatprep.subr.bf16.mxu0 0
    %194 = vmatpush1.bf16.xpose.msra.mxu0 0
    %195 = vmatprep.subr.bf16.mxu0 0
    %196 = vmatpush1.bf16.xpose.msra.mxu0 0
    %197 = vmatprep.subr.bf16.mxu0 0
    %198 = vmatpush1.bf16.xpose.msra.mxu0 0
    %199 = vmatprep.subr.bf16.mxu0 0
    %200 = vmatpush1.bf16.xpose.msra.mxu0 0
    %201 = vmatprep.subr.bf16.mxu0 0
    %202 = vmatpush1.bf16.xpose.msra.mxu0 0
    %203 = vmatprep.subr.bf16.mxu0 0
    %204 = vmatpush1.bf16.xpose.msra.mxu0 0
    %205 = vmatprep.subr.bf16.mxu0 0
    %206 = vmatpush1.bf16.xpose.msra.mxu0 0
    %207 = vmatprep.subr.bf16.mxu0 0
    %208 = vmatpush1.bf16.xpose.msra.mxu0 0
    %209 = vmatprep.subr.bf16.mxu0 0
    %210 = vmatpush1.bf16.xpose.msra.mxu0 0
    %211 = vmatprep.mubr.bf16.mxu0 0
    %212 = vmatmul.mubr.bf16.gmra.mrb[0].mxu0 %v174
    %v213 = vpop.f32.mrb[0].mxu0
    %v214 = vadd.f32 0.0, %v213
    %v215 = vpop.f32.mrb[0].mxu0
    %v216 = vpop.f32.mrb[0].mxu0
    %v217 = vpop.f32.mrb[0].mxu0
    %218 = vdwg.mxu0
    %220 = vrot.lane.b32.xlu0 %v162, 96
    %v221 = vpop.permute.xlu0 %220
    %v223 = vsel %vm172, %v134, 0
    %v226 = vsel %vm172, %v221, 0
    %228 = vmatprep.subr.bf16.mxu0 0
    %229 = vmatpush1.bf16.xpose.msra.mxu0 %v226
    %230 = vmatprep.subr.bf16.mxu0 0
    %231 = vmatpush1.bf16.xpose.msra.mxu0 0
    %232 = vmatprep.subr.bf16.mxu0 0
    %233 = vmatpush1.bf16.xpose.msra.mxu0 0
    %234 = vmatprep.subr.bf16.mxu0 0
    %235 = vmatpush1.bf16.xpose.msra.mxu0 0
    %236 = vmatprep.subr.bf16.mxu0 0
    %237 = vmatpush1.bf16.xpose.msra.mxu0 0
    %238 = vmatprep.subr.bf16.mxu0 0
    %239 = vmatpush1.bf16.xpose.msra.mxu0 0
    %240 = vmatprep.subr.bf16.mxu0 0
    %241 = vmatpush1.bf16.xpose.msra.mxu0 0
    %242 = vmatprep.subr.bf16.mxu0 0
    %243 = vmatpush1.bf16.xpose.msra.mxu0 0
    %244 = vmatprep.subr.bf16.mxu0 0
    %245 = vmatpush1.bf16.xpose.msra.mxu0 0
    %246 = vmatprep.subr.bf16.mxu0 0
    %247 = vmatpush1.bf16.xpose.msra.mxu0 0
    %248 = vmatprep.subr.bf16.mxu0 0
    %249 = vmatpush1.bf16.xpose.msra.mxu0 0
    %250 = vmatprep.subr.bf16.mxu0 0
    %251 = vmatpush1.bf16.xpose.msra.mxu0 0
    %252 = vmatprep.subr.bf16.mxu0 0
    %253 = vmatpush1.bf16.xpose.msra.mxu0 0
    %254 = vmatprep.subr.bf16.mxu0 0
    %255 = vmatpush1.bf16.xpose.msra.mxu0 0
    %256 = vmatprep.subr.bf16.mxu0 0
    %257 = vmatpush1.bf16.xpose.msra.mxu0 0
    %258 = vmatprep.subr.bf16.mxu0 0
    %259 = vmatpush1.bf16.xpose.msra.mxu0 0
    %260 = vmatprep.mubr.bf16.mxu0 0
    %261 = vmatmul.mubr.bf16.gmra.mrb[0].mxu0 %v223
    %v262 = vpop.f32.mrb[0].mxu0
    %v263 = vadd.f32 0.0, %v262
    %v264 = vpop.f32.mrb[0].mxu0
    %v265 = vpop.f32.mrb[0].mxu0
    %v266 = vpop.f32.mrb[0].mxu0
    %267 = vdwg.mxu0
    %269 = vrot.lane.b32.xlu0 %v163, 96
    %v270 = vpop.permute.xlu0 %269
    %v272 = vsel %vm172, %v135, 0
    %v275 = vsel %vm172, %v270, 0
    %277 = vmatprep.subr.bf16.mxu0 0
    %278 = vmatpush1.bf16.xpose.msra.mxu0 %v275
    %279 = vmatprep.subr.bf16.mxu0 0
    %280 = vmatpush1.bf16.xpose.msra.mxu0 0
    %281 = vmatprep.subr.bf16.mxu0 0
    %282 = vmatpush1.bf16.xpose.msra.mxu0 0
    %283 = vmatprep.subr.bf16.mxu0 0
    %284 = vmatpush1.bf16.xpose.msra.mxu0 0
    %285 = vmatprep.subr.bf16.mxu0 0
    %286 = vmatpush1.bf16.xpose.msra.mxu0 0
    %287 = vmatprep.subr.bf16.mxu0 0
    %288 = vmatpush1.bf16.xpose.msra.mxu0 0
    %289 = vmatprep.subr.bf16.mxu0 0
    %290 = vmatpush1.bf16.xpose.msra.mxu0 0
    %291 = vmatprep.subr.bf16.mxu0 0
    %292 = vmatpush1.bf16.xpose.msra.mxu0 0
    %293 = vmatprep.subr.bf16.mxu0 0
    %294 = vmatpush1.bf16.xpose.msra.mxu0 0
    %295 = vmatprep.subr.bf16.mxu0 0
    %296 = vmatpush1.bf16.xpose.msra.mxu0 0
    %297 = vmatprep.subr.bf16.mxu0 0
    %298 = vmatpush1.bf16.xpose.msra.mxu0 0
    %299 = vmatprep.subr.bf16.mxu0 0
    %300 = vmatpush1.bf16.xpose.msra.mxu0 0
    %301 = vmatprep.subr.bf16.mxu0 0
    %302 = vmatpush1.bf16.xpose.msra.mxu0 0
    %303 = vmatprep.subr.bf16.mxu0 0
    %304 = vmatpush1.bf16.xpose.msra.mxu0 0
    %305 = vmatprep.subr.bf16.mxu0 0
    %306 = vmatpush1.bf16.xpose.msra.mxu0 0
    %307 = vmatprep.subr.bf16.mxu0 0
    %308 = vmatpush1.bf16.xpose.msra.mxu0 0
    %309 = vmatprep.mubr.bf16.mxu0 0
    %310 = vmatmul.mubr.bf16.gmra.mrb[0].mxu0 %v272
    %v311 = vpop.f32.mrb[0].mxu0
    %v312 = vadd.f32 0.0, %v311
    %v313 = vpop.f32.mrb[0].mxu0
    %v314 = vpop.f32.mrb[0].mxu0
    %v315 = vpop.f32.mrb[0].mxu0
    %316 = vdwg.mxu0
    %318 = vrot.lane.b32.xlu0 %v164, 96
    %v319 = vpop.permute.xlu0 %318
    %v321 = vsel %vm172, %v136, 0
    %v324 = vsel %vm172, %v319, 0
    %326 = vmatprep.subr.bf16.mxu0 0
    %327 = vmatpush1.bf16.xpose.msra.mxu0 %v324
    %328 = vmatprep.subr.bf16.mxu0 0
    %329 = vmatpush1.bf16.xpose.msra.mxu0 0
    %330 = vmatprep.subr.bf16.mxu0 0
    %331 = vmatpush1.bf16.xpose.msra.mxu0 0
    %332 = vmatprep.subr.bf16.mxu0 0
    %333 = vmatpush1.bf16.xpose.msra.mxu0 0
    %334 = vmatprep.subr.bf16.mxu0 0
    %335 = vmatpush1.bf16.xpose.msra.mxu0 0
    %336 = vmatprep.subr.bf16.mxu0 0
    %337 = vmatpush1.bf16.xpose.msra.mxu0 0
    %338 = vmatprep.subr.bf16.mxu0 0
    %339 = vmatpush1.bf16.xpose.msra.mxu0 0
    %340 = vmatprep.subr.bf16.mxu0 0
    %341 = vmatpush1.bf16.xpose.msra.mxu0 0
    %342 = vmatprep.subr.bf16.mxu0 0
    %343 = vmatpush1.bf16.xpose.msra.mxu0 0
    %344 = vmatprep.subr.bf16.mxu0 0
    %345 = vmatpush1.bf16.xpose.msra.mxu0 0
    %346 = vmatprep.subr.bf16.mxu0 0
    %347 = vmatpush1.bf16.xpose.msra.mxu0 0
    %348 = vmatprep.subr.bf16.mxu0 0
    %349 = vmatpush1.bf16.xpose.msra.mxu0 0
    %350 = vmatprep.subr.bf16.mxu0 0
    %351 = vmatpush1.bf16.xpose.msra.mxu0 0
    %352 = vmatprep.subr.bf16.mxu0 0
    %353 = vmatpush1.bf16.xpose.msra.mxu0 0
    %354 = vmatprep.subr.bf16.mxu0 0
    %355 = vmatpush1.bf16.xpose.msra.mxu0 0
    %356 = vmatprep.subr.bf16.mxu0 0
    %357 = vmatpush1.bf16.xpose.msra.mxu0 0
    %358 = vmatprep.mubr.bf16.mxu0 0
    %359 = vmatmul.mubr.bf16.gmra.mrb[0].mxu0 %v321
    %v360 = vpop.f32.mrb[0].mxu0
    %v361 = vadd.f32 0.0, %v360
    %v362 = vpop.f32.mrb[0].mxu0
    %v363 = vpop.f32.mrb[0].mxu0
    %v364 = vpop.f32.mrb[0].mxu0
    %365 = vdwg.mxu0
    %367 = vrot.lane.b32.xlu0 %v165, 96
    %v368 = vpop.permute.xlu0 %367
    %v370 = vsel %vm172, %v137, 0
    %v373 = vsel %vm172, %v368, 0
    %375 = vmatprep.subr.bf16.mxu0 0
    %376 = vmatpush1.bf16.xpose.msra.mxu0 %v373
    %377 = vmatprep.subr.bf16.mxu0 0
    %378 = vmatpush1.bf16.xpose.msra.mxu0 0
    %379 = vmatprep.subr.bf16.mxu0 0
    %380 = vmatpush1.bf16.xpose.msra.mxu0 0
    %381 = vmatprep.subr.bf16.mxu0 0
    %382 = vmatpush1.bf16.xpose.msra.mxu0 0
    %383 = vmatprep.subr.bf16.mxu0 0
    %384 = vmatpush1.bf16.xpose.msra.mxu0 0
    %385 = vmatprep.subr.bf16.mxu0 0
    %386 = vmatpush1.bf16.xpose.msra.mxu0 0
    %387 = vmatprep.subr.bf16.mxu0 0
    %388 = vmatpush1.bf16.xpose.msra.mxu0 0
    %389 = vmatprep.subr.bf16.mxu0 0
    %390 = vmatpush1.bf16.xpose.msra.mxu0 0
    %391 = vmatprep.subr.bf16.mxu0 0
    %392 = vmatpush1.bf16.xpose.msra.mxu0 0
    %393 = vmatprep.subr.bf16.mxu0 0
    %394 = vmatpush1.bf16.xpose.msra.mxu0 0
    %395 = vmatprep.subr.bf16.mxu0 0
    %396 = vmatpush1.bf16.xpose.msra.mxu0 0
    %397 = vmatprep.subr.bf16.mxu0 0
    %398 = vmatpush1.bf16.xpose.msra.mxu0 0
    %399 = vmatprep.subr.bf16.mxu0 0
    %400 = vmatpush1.bf16.xpose.msra.mxu0 0
    %401 = vmatprep.subr.bf16.mxu0 0
    %402 = vmatpush1.bf16.xpose.msra.mxu0 0
    %403 = vmatprep.subr.bf16.mxu0 0
    %404 = vmatpush1.bf16.xpose.msra.mxu0 0
    %405 = vmatprep.subr.bf16.mxu0 0
    %406 = vmatpush1.bf16.xpose.msra.mxu0 0
    %407 = vmatprep.mubr.bf16.mxu0 0
    %408 = vmatmul.mubr.bf16.gmra.mrb[0].mxu0 %v370
    %v409 = vpop.f32.mrb[0].mxu0
    %v410 = vadd.f32 0.0, %v409
    %v411 = vpop.f32.mrb[0].mxu0
    %v412 = vpop.f32.mrb[0].mxu0
    %v413 = vpop.f32.mrb[0].mxu0
    %414 = vdwg.mxu0
    %416 = vrot.lane.b32.xlu0 %v166, 96
    %v417 = vpop.permute.xlu0 %416
    %v419 = vsel %vm172, %v138, 0
    %v422 = vsel %vm172, %v417, 0
    %424 = vmatprep.subr.bf16.mxu0 0
    %425 = vmatpush1.bf16.xpose.msra.mxu0 %v422
    %426 = vmatprep.subr.bf16.mxu0 0
    %427 = vmatpush1.bf16.xpose.msra.mxu0 0
    %428 = vmatprep.subr.bf16.mxu0 0
    %429 = vmatpush1.bf16.xpose.msra.mxu0 0
    %430 = vmatprep.subr.bf16.mxu0 0
    %431 = vmatpush1.bf16.xpose.msra.mxu0 0
    %432 = vmatprep.subr.bf16.mxu0 0
    %433 = vmatpush1.bf16.xpose.msra.mxu0 0
    %434 = vmatprep.subr.bf16.mxu0 0
    %435 = vmatpush1.bf16.xpose.msra.mxu0 0
    %436 = vmatprep.subr.bf16.mxu0 0
    %437 = vmatpush1.bf16.xpose.msra.mxu0 0
    %438 = vmatprep.subr.bf16.mxu0 0
    %439 = vmatpush1.bf16.xpose.msra.mxu0 0
    %440 = vmatprep.subr.bf16.mxu0 0
    %441 = vmatpush1.bf16.xpose.msra.mxu0 0
    %442 = vmatprep.subr.bf16.mxu0 0
    %443 = vmatpush1.bf16.xpose.msra.mxu0 0
    %444 = vmatprep.subr.bf16.mxu0 0
    %445 = vmatpush1.bf16.xpose.msra.mxu0 0
    %446 = vmatprep.subr.bf16.mxu0 0
    %447 = vmatpush1.bf16.xpose.msra.mxu0 0
    %448 = vmatprep.subr.bf16.mxu0 0
    %449 = vmatpush1.bf16.xpose.msra.mxu0 0
    %450 = vmatprep.subr.bf16.mxu0 0
    %451 = vmatpush1.bf16.xpose.msra.mxu0 0
    %452 = vmatprep.subr.bf16.mxu0 0
    %453 = vmatpush1.bf16.xpose.msra.mxu0 0
    %454 = vmatprep.subr.bf16.mxu0 0
    %455 = vmatpush1.bf16.xpose.msra.mxu0 0
    %456 = vmatprep.mubr.bf16.mxu0 0
    %457 = vmatmul.mubr.bf16.gmra.mrb[0].mxu0 %v419
    %v458 = vpop.f32.mrb[0].mxu0
    %v459 = vadd.f32 0.0, %v458
    %v460 = vpop.f32.mrb[0].mxu0
    %v461 = vpop.f32.mrb[0].mxu0
    %v462 = vpop.f32.mrb[0].mxu0
    %463 = vdwg.mxu0
    %465 = vrot.lane.b32.xlu0 %v167, 96
    %v466 = vpop.permute.xlu0 %465
    %v468 = vsel %vm172, %v139, 0
    %v471 = vsel %vm172, %v466, 0
    %473 = vmatprep.subr.bf16.mxu0 0
    %474 = vmatpush1.bf16.xpose.msra.mxu0 %v471
    %475 = vmatprep.subr.bf16.mxu0 0
    %476 = vmatpush1.bf16.xpose.msra.mxu0 0
    %477 = vmatprep.subr.bf16.mxu0 0
    %478 = vmatpush1.bf16.xpose.msra.mxu0 0
    %479 = vmatprep.subr.bf16.mxu0 0
    %480 = vmatpush1.bf16.xpose.msra.mxu0 0
    %481 = vmatprep.subr.bf16.mxu0 0
    %482 = vmatpush1.bf16.xpose.msra.mxu0 0
    %483 = vmatprep.subr.bf16.mxu0 0
    %484 = vmatpush1.bf16.xpose.msra.mxu0 0
    %485 = vmatprep.subr.bf16.mxu0 0
    %486 = vmatpush1.bf16.xpose.msra.mxu0 0
    %487 = vmatprep.subr.bf16.mxu0 0
    %488 = vmatpush1.bf16.xpose.msra.mxu0 0
    %489 = vmatprep.subr.bf16.mxu0 0
    %490 = vmatpush1.bf16.xpose.msra.mxu0 0
    %491 = vmatprep.subr.bf16.mxu0 0
    %492 = vmatpush1.bf16.xpose.msra.mxu0 0
    %493 = vmatprep.subr.bf16.mxu0 0
    %494 = vmatpush1.bf16.xpose.msra.mxu0 0
    %495 = vmatprep.subr.bf16.mxu0 0
    %496 = vmatpush1.bf16.xpose.msra.mxu0 0
    %497 = vmatprep.subr.bf16.mxu0 0
    %498 = vmatpush1.bf16.xpose.msra.mxu0 0
    %499 = vmatprep.subr.bf16.mxu0 0
    %500 = vmatpush1.bf16.xpose.msra.mxu0 0
    %501 = vmatprep.subr.bf16.mxu0 0
    %502 = vmatpush1.bf16.xpose.msra.mxu0 0
    %503 = vmatprep.subr.bf16.mxu0 0
    %504 = vmatpush1.bf16.xpose.msra.mxu0 0
    %505 = vmatprep.mubr.bf16.mxu0 0
    %506 = vmatmul.mubr.bf16.gmra.mrb[0].mxu0 %v468
    %v507 = vpop.f32.mrb[0].mxu0
    %v508 = vadd.f32 0.0, %v507
    %v509 = vpop.f32.mrb[0].mxu0
    %v510 = vpop.f32.mrb[0].mxu0
    %v511 = vpop.f32.mrb[0].mxu0
    %512 = vdwg.mxu0
    %514 = vrot.lane.b32.xlu0 %v168, 96
    %v515 = vpop.permute.xlu0 %514
    %v517 = vsel %vm172, %v140, 0
    %v520 = vsel %vm172, %v515, 0
    %522 = vmatprep.subr.bf16.mxu0 0
    %523 = vmatpush1.bf16.xpose.msra.mxu0 %v520
    %524 = vmatprep.subr.bf16.mxu0 0
    %525 = vmatpush1.bf16.xpose.msra.mxu0 0
    %526 = vmatprep.subr.bf16.mxu0 0
    %527 = vmatpush1.bf16.xpose.msra.mxu0 0
    %528 = vmatprep.subr.bf16.mxu0 0
    %529 = vmatpush1.bf16.xpose.msra.mxu0 0
    %530 = vmatprep.subr.bf16.mxu0 0
    %531 = vmatpush1.bf16.xpose.msra.mxu0 0
    %532 = vmatprep.subr.bf16.mxu0 0
    %533 = vmatpush1.bf16.xpose.msra.mxu0 0
    %534 = vmatprep.subr.bf16.mxu0 0
    %535 = vmatpush1.bf16.xpose.msra.mxu0 0
    %536 = vmatprep.subr.bf16.mxu0 0
    %537 = vmatpush1.bf16.xpose.msra.mxu0 0
    %538 = vmatprep.subr.bf16.mxu0 0
    %539 = vmatpush1.bf16.xpose.msra.mxu0 0
    %540 = vmatprep.subr.bf16.mxu0 0
    %541 = vmatpush1.bf16.xpose.msra.mxu0 0
    %542 = vmatprep.subr.bf16.mxu0 0
    %543 = vmatpush1.bf16.xpose.msra.mxu0 0
    %544 = vmatprep.subr.bf16.mxu0 0
    %545 = vmatpush1.bf16.xpose.msra.mxu0 0
    %546 = vmatprep.subr.bf16.mxu0 0
    %547 = vmatpush1.bf16.xpose.msra.mxu0 0
    %548 = vmatprep.subr.bf16.mxu0 0
    %549 = vmatpush1.bf16.xpose.msra.mxu0 0
    %550 = vmatprep.subr.bf16.mxu0 0
    %551 = vmatpush1.bf16.xpose.msra.mxu0 0
    %552 = vmatprep.subr.bf16.mxu0 0
    %553 = vmatpush1.bf16.xpose.msra.mxu0 0
    %554 = vmatprep.mubr.bf16.mxu0 0
    %555 = vmatmul.mubr.bf16.gmra.mrb[0].mxu0 %v517
    %v556 = vpop.f32.mrb[0].mxu0
    %v557 = vadd.f32 0.0, %v556
    %v558 = vpop.f32.mrb[0].mxu0
    %v559 = vpop.f32.mrb[0].mxu0
    %v560 = vpop.f32.mrb[0].mxu0
    %561 = vdwg.mxu0
    %v562 = vsel %vm172, %v214, -inf
    %563 = vmax.xlane.f32.xlu0 %v562
    %v564 = vpop.xlane.xlu0 %563
    %v565 = vsel %vm172, %v263, -inf
    %566 = vmax.xlane.f32.xlu0 %v565
    %v567 = vpop.xlane.xlu0 %566
    %v568 = vsel %vm172, %v312, -inf
    %569 = vmax.xlane.f32.xlu0 %v568
    %v570 = vpop.xlane.xlu0 %569
    %v571 = vsel %vm172, %v361, -inf
    %572 = vmax.xlane.f32.xlu0 %v571
    %v573 = vpop.xlane.xlu0 %572
    %v574 = vsel %vm172, %v410, -inf
    %575 = vmax.xlane.f32.xlu0 %v574
    %v576 = vpop.xlane.xlu0 %575
    %v577 = vsel %vm172, %v459, -inf
    %578 = vmax.xlane.f32.xlu0 %v577
    %v579 = vpop.xlane.xlu0 %578
    %v580 = vsel %vm172, %v508, -inf
    %581 = vmax.xlane.f32.xlu0 %v580
    %v582 = vpop.xlane.xlu0 %581
    %v583 = vsel %vm172, %v557, -inf
    %584 = vmax.xlane.f32.xlu0 %v583
    %v585 = vpop.xlane.xlu0 %584
    %v586 = vsub.f32 %v214, %v564
    %v587 = vsub.f32 %v263, %v567
    %v588 = vsub.f32 %v312, %v570
    %v589 = vsub.f32 %v361, %v573
    %v590 = vsub.f32 %v410, %v576
    %v591 = vsub.f32 %v459, %v579
    %v592 = vsub.f32 %v508, %v582
    %v593 = vsub.f32 %v557, %v585
    %v594 = vmul.f32 %v586, 1.442695
    %v595 = vpow.pop %v594
    %v596 = vmul.f32 %v587, 1.442695
    %v597 = vpow.pop %v596
    %v598 = vmul.f32 %v588, 1.442695
    %v599 = vpow.pop %v598
    %v600 = vmul.f32 %v589, 1.442695
    %v601 = vpow.pop %v600
    %v602 = vmul.f32 %v590, 1.442695
    %v603 = vpow.pop %v602
    %v604 = vmul.f32 %v591, 1.442695
    %v605 = vpow.pop %v604
    %v606 = vmul.f32 %v592, 1.442695
    %v607 = vpow.pop %v606
    %v608 = vmul.f32 %v593, 1.442695
    %v609 = vpow.pop %v608
    %v610 = vsel %vm172, %v595, 0.0
    %611 = vadd.xlane.f32.xlu0 %v610
    %v612 = vpop.xlane.xlu0 %611
    %v613 = vsel %vm172, %v597, 0.0
    %614 = vadd.xlane.f32.xlu0 %v613
    %v615 = vpop.xlane.xlu0 %614
    %v616 = vsel %vm172, %v599, 0.0
    %617 = vadd.xlane.f32.xlu0 %v616
    %v618 = vpop.xlane.xlu0 %617
    %v619 = vsel %vm172, %v601, 0.0
    %620 = vadd.xlane.f32.xlu0 %v619
    %v621 = vpop.xlane.xlu0 %620
    %v622 = vsel %vm172, %v603, 0.0
    %623 = vadd.xlane.f32.xlu0 %v622
    %v624 = vpop.xlane.xlu0 %623
    %v625 = vsel %vm172, %v605, 0.0
    %626 = vadd.xlane.f32.xlu0 %v625
    %v627 = vpop.xlane.xlu0 %626
    %v628 = vsel %vm172, %v607, 0.0
    %629 = vadd.xlane.f32.xlu0 %v628
    %v630 = vpop.xlane.xlu0 %629
    %v631 = vsel %vm172, %v609, 0.0
    %632 = vadd.xlane.f32.xlu0 %v631
    %v633 = vpop.xlane.xlu0 %632
    %v634 = vrcp.pop %v612
    %v635 = vrcp.pop %v615
    %v636 = vrcp.pop %v618
    %v637 = vrcp.pop %v621
    %v638 = vrcp.pop %v624
    %v639 = vrcp.pop %v627
    %v640 = vrcp.pop %v630
    %v641 = vrcp.pop %v633
    %v642 = vmul.f32 %v595, %v634
    %v643 = vmul.f32 %v597, %v635
    %v644 = vmul.f32 %v599, %v636
    %v645 = vmul.f32 %v601, %v637
    %v646 = vmul.f32 %v603, %v638
    %v647 = vmul.f32 %v605, %v639
    %v648 = vmul.f32 %v607, %v640
    %v649 = vmul.f32 %v609, %v641
    %v650 = vsel %vm172, %v642, 0.0
    %v651 = vsel %vm172, %v643, 0.0
    %v652 = vadd.f32 %v650, %v651
    %v653 = vsel %vm172, %v644, 0.0
    %v654 = vadd.f32 %v652, %v653
    %v655 = vsel %vm172, %v645, 0.0
    %v656 = vadd.f32 %v654, %v655
    %v657 = vsel %vm172, %v646, 0.0
    %v658 = vsel %vm172, %v647, 0.0
    %v659 = vadd.f32 %v657, %v658
    %v660 = vsel %vm172, %v648, 0.0
    %v661 = vadd.f32 %v659, %v660
    %v662 = vsel %vm172, %v649, 0.0
    %v663 = vadd.f32 %v661, %v662
    %v664 = vmul.f32 %v656, 0.25
    %v665 = vmul.f32 %v663, 0.25
    %666 = vst.msk [vmem:[#allocation6] sm:$0xff] %vm172, %v664
    %667 = vst.msk [vmem:[#allocation6 + $0x8] sm:$0xff] %vm172, %v665
    %v668 = vpack.c.bf16 %v642, %v642
    %v669 = vpack.c.bf16 %v643, %v643
    %v670 = vpack.c.bf16 %v644, %v644
    %v671 = vpack.c.bf16 %v645, %v645
    %v672 = vpack.c.bf16 %v646, %v646
    %v673 = vpack.c.bf16 %v647, %v647
    %v674 = vpack.c.bf16 %v648, %v648
    %v675 = vpack.c.bf16 %v649, %v649
    %676 = vrot.lane.b32.xlu0 %v161, 64
    %v677 = vpop.permute.xlu0 %676
    %v679 = vsel %vm172, %v668, 0
    %vm681 = vcmask 1043456
    %v683 = vsel %vm681, %v677, 0
    %685 = vmatprep.subr.bf16.mxu0 0
    %686 = vmatpush1.bf16.msra.mxu0 %v683
    %687 = vmatprep.subr.bf16.mxu0 0
    %688 = vmatpush1.bf16.msra.mxu0 0
    %689 = vmatprep.subr.bf16.mxu0 0
    %690 = vmatpush1.bf16.msra.mxu0 0
    %691 = vmatprep.subr.bf16.mxu0 0
    %692 = vmatpush1.bf16.msra.mxu0 0
    %693 = vmatprep.subr.bf16.mxu0 0
    %694 = vmatpush1.bf16.msra.mxu0 0
    %695 = vmatprep.subr.bf16.mxu0 0
    %696 = vmatpush1.bf16.msra.mxu0 0
    %697 = vmatprep.subr.bf16.mxu0 0
    %698 = vmatpush1.bf16.msra.mxu0 0
    %699 = vmatprep.subr.bf16.mxu0 0
    %700 = vmatpush1.bf16.msra.mxu0 0
    %701 = vmatprep.subr.bf16.mxu0 0
    %702 = vmatpush1.bf16.msra.mxu0 0
    %703 = vmatprep.subr.bf16.mxu0 0
    %704 = vmatpush1.bf16.msra.mxu0 0
    %705 = vmatprep.subr.bf16.mxu0 0
    %706 = vmatpush1.bf16.msra.mxu0 0
    %707 = vmatprep.subr.bf16.mxu0 0
    %708 = vmatpush1.bf16.msra.mxu0 0
    %709 = vmatprep.subr.bf16.mxu0 0
    %710 = vmatpush1.bf16.msra.mxu0 0
    %711 = vmatprep.subr.bf16.mxu0 0
    %712 = vmatpush1.bf16.msra.mxu0 0
    %713 = vmatprep.subr.bf16.mxu0 0
    %714 = vmatpush1.bf16.msra.mxu0 0
    %715 = vmatprep.subr.bf16.mxu0 0
    %716 = vmatpush1.bf16.msra.mxu0 0
    %717 = vmatprep.mubr.bf16.mxu0 0
    %718 = vmatmul.mubr.bf16.gmra.mrb[0].mxu0 %v679
    %v719 = vpop.f32.mrb[0].mxu0
    %v720 = vadd.f32 0.0, %v719
    %v721 = vpop.f32.mrb[0].mxu0
    %v722 = vpop.f32.mrb[0].mxu0
    %v723 = vpop.f32.mrb[0].mxu0
    %724 = vdwg.mxu0
    %725 = vrot.lane.b32.xlu0 %v162, 64
    %v726 = vpop.permute.xlu0 %725
    %v728 = vsel %vm172, %v669, 0
    %v731 = vsel %vm681, %v726, 0
    %733 = vmatprep.subr.bf16.mxu0 0
    %734 = vmatpush1.bf16.msra.mxu0 %v731
    %735 = vmatprep.subr.bf16.mxu0 0
    %736 = vmatpush1.bf16.msra.mxu0 0
    %737 = vmatprep.subr.bf16.mxu0 0
    %738 = vmatpush1.bf16.msra.mxu0 0
    %739 = vmatprep.subr.bf16.mxu0 0
    %740 = vmatpush1.bf16.msra.mxu0 0
    %741 = vmatprep.subr.bf16.mxu0 0
    %742 = vmatpush1.bf16.msra.mxu0 0
    %743 = vmatprep.subr.bf16.mxu0 0
    %744 = vmatpush1.bf16.msra.mxu0 0
    %745 = vmatprep.subr.bf16.mxu0 0
    %746 = vmatpush1.bf16.msra.mxu0 0
    %747 = vmatprep.subr.bf16.mxu0 0
    %748 = vmatpush1.bf16.msra.mxu0 0
    %749 = vmatprep.subr.bf16.mxu0 0
    %750 = vmatpush1.bf16.msra.mxu0 0
    %751 = vmatprep.subr.bf16.mxu0 0
    %752 = vmatpush1.bf16.msra.mxu0 0
    %753 = vmatprep.subr.bf16.mxu0 0
    %754 = vmatpush1.bf16.msra.mxu0 0
    %755 = vmatprep.subr.bf16.mxu0 0
    %756 = vmatpush1.bf16.msra.mxu0 0
    %757 = vmatprep.subr.bf16.mxu0 0
    %758 = vmatpush1.bf16.msra.mxu0 0
    %759 = vmatprep.subr.bf16.mxu0 0
    %760 = vmatpush1.bf16.msra.mxu0 0
    %761 = vmatprep.subr.bf16.mxu0 0
    %762 = vmatpush1.bf16.msra.mxu0 0
    %763 = vmatprep.subr.bf16.mxu0 0
    %764 = vmatpush1.bf16.msra.mxu0 0
    %765 = vmatprep.mubr.bf16.mxu0 0
    %766 = vmatmul.mubr.bf16.gmra.mrb[0].mxu0 %v728
    %v767 = vpop.f32.mrb[0].mxu0
    %v768 = vadd.f32 0.0, %v767
    %v769 = vpop.f32.mrb[0].mxu0
    %v770 = vpop.f32.mrb[0].mxu0
    %v771 = vpop.f32.mrb[0].mxu0
    %772 = vdwg.mxu0
    %773 = vrot.lane.b32.xlu0 %v163, 64
    %v774 = vpop.permute.xlu0 %773
    %v776 = vsel %vm172, %v670, 0
    %v779 = vsel %vm681, %v774, 0
    %781 = vmatprep.subr.bf16.mxu0 0
    %782 = vmatpush1.bf16.msra.mxu0 %v779
    %783 = vmatprep.subr.bf16.mxu0 0
    %784 = vmatpush1.bf16.msra.mxu0 0
    %785 = vmatprep.subr.bf16.mxu0 0
    %786 = vmatpush1.bf16.msra.mxu0 0
    %787 = vmatprep.subr.bf16.mxu0 0
    %788 = vmatpush1.bf16.msra.mxu0 0
    %789 = vmatprep.subr.bf16.mxu0 0
    %790 = vmatpush1.bf16.msra.mxu0 0
    %791 = vmatprep.subr.bf16.mxu0 0
    %792 = vmatpush1.bf16.msra.mxu0 0
    %793 = vmatprep.subr.bf16.mxu0 0
    %794 = vmatpush1.bf16.msra.mxu0 0
    %795 = vmatprep.subr.bf16.mxu0 0
    %796 = vmatpush1.bf16.msra.mxu0 0
    %797 = vmatprep.subr.bf16.mxu0 0
    %798 = vmatpush1.bf16.msra.mxu0 0
    %799 = vmatprep.subr.bf16.mxu0 0
    %800 = vmatpush1.bf16.msra.mxu0 0
    %801 = vmatprep.subr.bf16.mxu0 0
    %802 = vmatpush1.bf16.msra.mxu0 0
    %803 = vmatprep.subr.bf16.mxu0 0
    %804 = vmatpush1.bf16.msra.mxu0 0
    %805 = vmatprep.subr.bf16.mxu0 0
    %806 = vmatpush1.bf16.msra.mxu0 0
    %807 = vmatprep.subr.bf16.mxu0 0
    %808 = vmatpush1.bf16.msra.mxu0 0
    %809 = vmatprep.subr.bf16.mxu0 0
    %810 = vmatpush1.bf16.msra.mxu0 0
    %811 = vmatprep.subr.bf16.mxu0 0
    %812 = vmatpush1.bf16.msra.mxu0 0
    %813 = vmatprep.mubr.bf16.mxu0 0
    %814 = vmatmul.mubr.bf16.gmra.mrb[0].mxu0 %v776
    %v815 = vpop.f32.mrb[0].mxu0
    %v816 = vadd.f32 0.0, %v815
    %v817 = vpop.f32.mrb[0].mxu0
    %v818 = vpop.f32.mrb[0].mxu0
    %v819 = vpop.f32.mrb[0].mxu0
    %820 = vdwg.mxu0
    %821 = vrot.lane.b32.xlu0 %v164, 64
    %v822 = vpop.permute.xlu0 %821
    %v824 = vsel %vm172, %v671, 0
    %v827 = vsel %vm681, %v822, 0
    %829 = vmatprep.subr.bf16.mxu0 0
    %830 = vmatpush1.bf16.msra.mxu0 %v827
    %831 = vmatprep.subr.bf16.mxu0 0
    %832 = vmatpush1.bf16.msra.mxu0 0
    %833 = vmatprep.subr.bf16.mxu0 0
    %834 = vmatpush1.bf16.msra.mxu0 0
    %835 = vmatprep.subr.bf16.mxu0 0
    %836 = vmatpush1.bf16.msra.mxu0 0
    %837 = vmatprep.subr.bf16.mxu0 0
    %838 = vmatpush1.bf16.msra.mxu0 0
    %839 = vmatprep.subr.bf16.mxu0 0
    %840 = vmatpush1.bf16.msra.mxu0 0
    %841 = vmatprep.subr.bf16.mxu0 0
    %842 = vmatpush1.bf16.msra.mxu0 0
    %843 = vmatprep.subr.bf16.mxu0 0
    %844 = vmatpush1.bf16.msra.mxu0 0
    %845 = vmatprep.subr.bf16.mxu0 0
    %846 = vmatpush1.bf16.msra.mxu0 0
    %847 = vmatprep.subr.bf16.mxu0 0
    %848 = vmatpush1.bf16.msra.mxu0 0
    %849 = vmatprep.subr.bf16.mxu0 0
    %850 = vmatpush1.bf16.msra.mxu0 0
    %851 = vmatprep.subr.bf16.mxu0 0
    %852 = vmatpush1.bf16.msra.mxu0 0
    %853 = vmatprep.subr.bf16.mxu0 0
    %854 = vmatpush1.bf16.msra.mxu0 0
    %855 = vmatprep.subr.bf16.mxu0 0
    %856 = vmatpush1.bf16.msra.mxu0 0
    %857 = vmatprep.subr.bf16.mxu0 0
    %858 = vmatpush1.bf16.msra.mxu0 0
    %859 = vmatprep.subr.bf16.mxu0 0
    %860 = vmatpush1.bf16.msra.mxu0 0
    %861 = vmatprep.mubr.bf16.mxu0 0
    %862 = vmatmul.mubr.bf16.gmra.mrb[0].mxu0 %v824
    %v863 = vpop.f32.mrb[0].mxu0
    %v864 = vadd.f32 0.0, %v863
    %v865 = vpop.f32.mrb[0].mxu0
    %v866 = vpop.f32.mrb[0].mxu0
    %v867 = vpop.f32.mrb[0].mxu0
    %868 = vdwg.mxu0
    %869 = vrot.lane.b32.xlu0 %v165, 64
    %v870 = vpop.permute.xlu0 %869
    %v872 = vsel %vm172, %v672, 0
    %v875 = vsel %vm681, %v870, 0
    %877 = vmatprep.subr.bf16.mxu0 0
    %878 = vmatpush1.bf16.msra.mxu0 %v875
    %879 = vmatprep.subr.bf16.mxu0 0
    %880 = vmatpush1.bf16.msra.mxu0 0
    %881 = vmatprep.subr.bf16.mxu0 0
    %882 = vmatpush1.bf16.msra.mxu0 0
    %883 = vmatprep.subr.bf16.mxu0 0
    %884 = vmatpush1.bf16.msra.mxu0 0
    %885 = vmatprep.subr.bf16.mxu0 0
    %886 = vmatpush1.bf16.msra.mxu0 0
    %887 = vmatprep.subr.bf16.mxu0 0
    %888 = vmatpush1.bf16.msra.mxu0 0
    %889 = vmatprep.subr.bf16.mxu0 0
    %890 = vmatpush1.bf16.msra.mxu0 0
    %891 = vmatprep.subr.bf16.mxu0 0
    %892 = vmatpush1.bf16.msra.mxu0 0
    %893 = vmatprep.subr.bf16.mxu0 0
    %894 = vmatpush1.bf16.msra.mxu0 0
    %895 = vmatprep.subr.bf16.mxu0 0
    %896 = vmatpush1.bf16.msra.mxu0 0
    %897 = vmatprep.subr.bf16.mxu0 0
    %898 = vmatpush1.bf16.msra.mxu0 0
    %899 = vmatprep.subr.bf16.mxu0 0
    %900 = vmatpush1.bf16.msra.mxu0 0
    %901 = vmatprep.subr.bf16.mxu0 0
    %902 = vmatpush1.bf16.msra.mxu0 0
    %903 = vmatprep.subr.bf16.mxu0 0
    %904 = vmatpush1.bf16.msra.mxu0 0
    %905 = vmatprep.subr.bf16.mxu0 0
    %906 = vmatpush1.bf16.msra.mxu0 0
    %907 = vmatprep.subr.bf16.mxu0 0
    %908 = vmatpush1.bf16.msra.mxu0 0
    %909 = vmatprep.mubr.bf16.mxu0 0
    %910 = vmatmul.mubr.bf16.gmra.mrb[0].mxu0 %v872
    %v911 = vpop.f32.mrb[0].mxu0
    %v912 = vadd.f32 0.0, %v911
    %v913 = vpop.f32.mrb[0].mxu0
    %v914 = vpop.f32.mrb[0].mxu0
    %v915 = vpop.f32.mrb[0].mxu0
    %916 = vdwg.mxu0
    %917 = vrot.lane.b32.xlu0 %v166, 64
    %v918 = vpop.permute.xlu0 %917
    %v920 = vsel %vm172, %v673, 0
    %v923 = vsel %vm681, %v918, 0
    %925 = vmatprep.subr.bf16.mxu0 0
    %926 = vmatpush1.bf16.msra.mxu0 %v923
    %927 = vmatprep.subr.bf16.mxu0 0
    %928 = vmatpush1.bf16.msra.mxu0 0
    %929 = vmatprep.subr.bf16.mxu0 0
    %930 = vmatpush1.bf16.msra.mxu0 0
    %931 = vmatprep.subr.bf16.mxu0 0
    %932 = vmatpush1.bf16.msra.mxu0 0
    %933 = vmatprep.subr.bf16.mxu0 0
    %934 = vmatpush1.bf16.msra.mxu0 0
    %935 = vmatprep.subr.bf16.mxu0 0
    %936 = vmatpush1.bf16.msra.mxu0 0
    %937 = vmatprep.subr.bf16.mxu0 0
    %938 = vmatpush1.bf16.msra.mxu0 0
    %939 = vmatprep.subr.bf16.mxu0 0
    %940 = vmatpush1.bf16.msra.mxu0 0
    %941 = vmatprep.subr.bf16.mxu0 0
    %942 = vmatpush1.bf16.msra.mxu0 0
    %943 = vmatprep.subr.bf16.mxu0 0
    %944 = vmatpush1.bf16.msra.mxu0 0
    %945 = vmatprep.subr.bf16.mxu0 0
    %946 = vmatpush1.bf16.msra.mxu0 0
    %947 = vmatprep.subr.bf16.mxu0 0
    %948 = vmatpush1.bf16.msra.mxu0 0
    %949 = vmatprep.subr.bf16.mxu0 0
    %950 = vmatpush1.bf16.msra.mxu0 0
    %951 = vmatprep.subr.bf16.mxu0 0
    %952 = vmatpush1.bf16.msra.mxu0 0
    %953 = vmatprep.subr.bf16.mxu0 0
    %954 = vmatpush1.bf16.msra.mxu0 0
    %955 = vmatprep.subr.bf16.mxu0 0
    %956 = vmatpush1.bf16.msra.mxu0 0
    %957 = vmatprep.mubr.bf16.mxu0 0
    %958 = vmatmul.mubr.bf16.gmra.mrb[0].mxu0 %v920
    %v959 = vpop.f32.mrb[0].mxu0
    %v960 = vadd.f32 0.0, %v959
    %v961 = vpop.f32.mrb[0].mxu0
    %v962 = vpop.f32.mrb[0].mxu0
    %v963 = vpop.f32.mrb[0].mxu0
    %964 = vdwg.mxu0
    %965 = vrot.lane.b32.xlu0 %v167, 64
    %v966 = vpop.permute.xlu0 %965
    %v968 = vsel %vm172, %v674, 0
    %v971 = vsel %vm681, %v966, 0
    %973 = vmatprep.subr.bf16.mxu0 0
    %974 = vmatpush1.bf16.msra.mxu0 %v971
    %975 = vmatprep.subr.bf16.mxu0 0
    %976 = vmatpush1.bf16.msra.mxu0 0
    %977 = vmatprep.subr.bf16.mxu0 0
    %978 = vmatpush1.bf16.msra.mxu0 0
    %979 = vmatprep.subr.bf16.mxu0 0
    %980 = vmatpush1.bf16.msra.mxu0 0
    %981 = vmatprep.subr.bf16.mxu0 0
    %982 = vmatpush1.bf16.msra.mxu0 0
    %983 = vmatprep.subr.bf16.mxu0 0
    %984 = vmatpush1.bf16.msra.mxu0 0
    %985 = vmatprep.subr.bf16.mxu0 0
    %986 = vmatpush1.bf16.msra.mxu0 0
    %987 = vmatprep.subr.bf16.mxu0 0
    %988 = vmatpush1.bf16.msra.mxu0 0
    %989 = vmatprep.subr.bf16.mxu0 0
    %990 = vmatpush1.bf16.msra.mxu0 0
    %991 = vmatprep.subr.bf16.mxu0 0
    %992 = vmatpush1.bf16.msra.mxu0 0
    %993 = vmatprep.subr.bf16.mxu0 0
    %994 = vmatpush1.bf16.msra.mxu0 0
    %995 = vmatprep.subr.bf16.mxu0 0
    %996 = vmatpush1.bf16.msra.mxu0 0
    %997 = vmatprep.subr.bf16.mxu0 0
    %998 = vmatpush1.bf16.msra.mxu0 0
    %999 = vmatprep.subr.bf16.mxu0 0
    %1000 = vmatpush1.bf16.msra.mxu0 0
    %1001 = vmatprep.subr.bf16.mxu0 0
    %1002 = vmatpush1.bf16.msra.mxu0 0
    %1003 = vmatprep.subr.bf16.mxu0 0
    %1004 = vmatpush1.bf16.msra.mxu0 0
    %1005 = vmatprep.mubr.bf16.mxu0 0
    %1006 = vmatmul.mubr.bf16.gmra.mrb[0].mxu0 %v968
    %v1007 = vpop.f32.mrb[0].mxu0
    %v1008 = vadd.f32 0.0, %v1007
    %v1009 = vpop.f32.mrb[0].mxu0
    %v1010 = vpop.f32.mrb[0].mxu0
    %v1011 = vpop.f32.mrb[0].mxu0
    %1012 = vdwg.mxu0
    %1013 = vrot.lane.b32.xlu0 %v168, 64
    %v1014 = vpop.permute.xlu0 %1013
    %v1016 = vsel %vm172, %v675, 0
    %v1019 = vsel %vm681, %v1014, 0
    %1021 = vmatprep.subr.bf16.mxu0 0
    %1022 = vmatpush1.bf16.msra.mxu0 %v1019
    %1023 = vmatprep.subr.bf16.mxu0 0
    %1024 = vmatpush1.bf16.msra.mxu0 0
    %1025 = vmatprep.subr.bf16.mxu0 0
    %1026 = vmatpush1.bf16.msra.mxu0 0
    %1027 = vmatprep.subr.bf16.mxu0 0
    %1028 = vmatpush1.bf16.msra.mxu0 0
    %1029 = vmatprep.subr.bf16.mxu0 0
    %1030 = vmatpush1.bf16.msra.mxu0 0
    %1031 = vmatprep.subr.bf16.mxu0 0
    %1032 = vmatpush1.bf16.msra.mxu0 0
    %1033 = vmatprep.subr.bf16.mxu0 0
    %1034 = vmatpush1.bf16.msra.mxu0 0
    %1035 = vmatprep.subr.bf16.mxu0 0
    %1036 = vmatpush1.bf16.msra.mxu0 0
    %1037 = vmatprep.subr.bf16.mxu0 0
    %1038 = vmatpush1.bf16.msra.mxu0 0
    %1039 = vmatprep.subr.bf16.mxu0 0
    %1040 = vmatpush1.bf16.msra.mxu0 0
    %1041 = vmatprep.subr.bf16.mxu0 0
    %1042 = vmatpush1.bf16.msra.mxu0 0
    %1043 = vmatprep.subr.bf16.mxu0 0
    %1044 = vmatpush1.bf16.msra.mxu0 0
    %1045 = vmatprep.subr.bf16.mxu0 0
    %1046 = vmatpush1.bf16.msra.mxu0 0
    %1047 = vmatprep.subr.bf16.mxu0 0
    %1048 = vmatpush1.bf16.msra.mxu0 0
    %1049 = vmatprep.subr.bf16.mxu0 0
    %1050 = vmatpush1.bf16.msra.mxu0 0
    %1051 = vmatprep.subr.bf16.mxu0 0
    %1052 = vmatpush1.bf16.msra.mxu0 0
    %1053 = vmatprep.mubr.bf16.mxu0 0
    %1054 = vmatmul.mubr.bf16.gmra.mrb[0].mxu0 %v1016
    %v1055 = vpop.f32.mrb[0].mxu0
    %v1056 = vadd.f32 0.0, %v1055
    %v1057 = vpop.f32.mrb[0].mxu0
    %v1058 = vpop.f32.mrb[0].mxu0
    %v1059 = vpop.f32.mrb[0].mxu0
    %1060 = vdwg.mxu0
    %1063 = vrot.lane.b32.xlu0 %v768, 8
    %v1064 = vpop.permute.xlu0 %1063
    %1065 = vrot.lane.b32.xlu0 %v960, 8
    %v1066 = vpop.permute.xlu0 %1065
    %1071 = vrot.lane.b32.xlu0 %v816, 16
    %v1072 = vpop.permute.xlu0 %1071
    %1073 = vrot.lane.b32.xlu0 %v1008, 16
    %v1074 = vpop.permute.xlu0 %1073
    %1079 = vrot.lane.b32.xlu0 %v864, 24
    %v1080 = vpop.permute.xlu0 %1079
    %1081 = vrot.lane.b32.xlu0 %v1056, 24
    %v1082 = vpop.permute.xlu0 %1081
    %v1085 = vsel %vm172, %v720, %v1064
    %v1086 = vsel %vm172, %v912, %v1066
    %vm1087 = vcmask 130048
    %v1088 = vsel %vm1087, %v1085, %v1072
    %v1089 = vsel %vm1087, %v1086, %v1074
    %vm1090 = vcmask 195584
    %v1091 = vsel %vm1090, %v1088, %v1080
    %v1092 = vsel %vm1090, %v1089, %v1082
    %v1093 = vpack.c.bf16 %v1092, %v1091
    %v1094 = vld [vmem:[%s2] sm:$0xf]
    %v1095 = vld [vmem:[%s2 + $0x4] sm:$0xf]
    %v1096 = vld [vmem:[%s2 + $0x8] sm:$0xf]
    %v1097 = vld [vmem:[%s2 + $0xc] sm:$0xf]
    %v1098 = vlaneseq
    %v1099 = vshrl.u32 %v1098, 7
    %v1100 = vsub.s32 1, %v1099
    %v1101 = vrot.slane %v44, %v1100
    %v1106 = vunpack.c.l.b16 %v1094
    %v1107 = vunpack.c.l.b16 %v1095
    %v1108 = vunpack.c.l.b16 %v1096
    %v1109 = vunpack.c.l.b16 %v1097
    %v1110 = vpack.c.b16 %v1107, %v1106
    %v1111 = vpack.c.b16 %v1109, %v1108
    %v1115 = vsel %vm66, %v1093, 0
    %1117 = vmatprep.subr.bf16.mxu0 0
    %1118 = vmatpush1.bf16.msra.mxu0 %v1110
    %1119 = vmatprep.subr.bf16.mxu0 0
    %1120 = vmatpush1.bf16.msra.mxu0 %v1111
    %1121 = vmatprep.subr.bf16.mxu0 0
    %1122 = vmatpush1.bf16.msra.mxu0 0
    %1123 = vmatprep.subr.bf16.mxu0 0
    %1124 = vmatpush1.bf16.msra.mxu0 0
    %1125 = vmatprep.subr.bf16.mxu0 0
    %1126 = vmatpush1.bf16.msra.mxu0 0
    %1127 = vmatprep.subr.bf16.mxu0 0
    %1128 = vmatpush1.bf16.msra.mxu0 0
    %1129 = vmatprep.subr.bf16.mxu0 0
    %1130 = vmatpush1.bf16.msra.mxu0 0
    %1131 = vmatprep.subr.bf16.mxu0 0
    %1132 = vmatpush1.bf16.msra.mxu0 0
    %1133 = vmatprep.subr.bf16.mxu0 0
    %1134 = vmatpush1.bf16.msra.mxu0 0
    %1135 = vmatprep.subr.bf16.mxu0 0
    %1136 = vmatpush1.bf16.msra.mxu0 0
    %1137 = vmatprep.subr.bf16.mxu0 0
    %1138 = vmatpush1.bf16.msra.mxu0 0
    %1139 = vmatprep.subr.bf16.mxu0 0
    %1140 = vmatpush1.bf16.msra.mxu0 0
    %1141 = vmatprep.subr.bf16.mxu0 0
    %1142 = vmatpush1.bf16.msra.mxu0 0
    %1143 = vmatprep.subr.bf16.mxu0 0
    %1144 = vmatpush1.bf16.msra.mxu0 0
    %1145 = vmatprep.subr.bf16.mxu0 0
    %1146 = vmatpush1.bf16.msra.mxu0 0
    %1147 = vmatprep.subr.bf16.mxu0 0
    %1148 = vmatpush1.bf16.msra.mxu0 0
    %1149 = vmatprep.mubr.bf16.mxu0 0
    %1150 = vmatmul.mubr.bf16.gmra.mrb[0].mxu0 %v1115
    %v1151 = vpop.f32.mrb[0].mxu0
    %v1152 = vadd.f32 %v1101, %v1151
    %v1153 = vpop.f32.mrb[0].mxu0
    %v1154 = vpop.f32.mrb[0].mxu0
    %v1155 = vadd.f32 %v1101, %v1154
    %v1156 = vpop.f32.mrb[0].mxu0
    %1157 = vdwg.mxu0
    %v1158 = vadd.f32 %v42, %v1152
    %v1159 = vadd.f32 %v43, %v1155
    %v1160 = vsel %vm66, %v1158, 0.0
    %1161 = vadd.xlane.f32.xlu0 %v1160
    %v1162 = vpop.xlane.xlu0 %1161
    %v1163 = vsel %vm66, %v1159, 0.0
    %1164 = vadd.xlane.f32.xlu0 %v1163
    %v1165 = vpop.xlane.xlu0 %1164
    %v1166 = vrcp.pop 32.0
    %v1167 = vmul.f32 %v1162, %v1166
    %v1168 = vmul.f32 %v1165, %v1166
    %v1169 = vsub.f32 %v1158, %v1167
    %v1170 = vsub.f32 %v1159, %v1168
    %v1171 = vmul.f32 %v1169, %v1169
    %v1172 = vmul.f32 %v1170, %v1170
    %v1173 = vsel %vm66, %v1171, 0.0
    %1174 = vadd.xlane.f32.xlu0 %v1173
    %v1175 = vpop.xlane.xlu0 %1174
    %v1176 = vsel %vm66, %v1172, 0.0
    %1177 = vadd.xlane.f32.xlu0 %v1176
    %v1178 = vpop.xlane.xlu0 %1177
    %v1179 = vmul.f32 %v1175, %v1166
    %v1180 = vmul.f32 %v1178, %v1166
    %v1181 = vadd.f32 %v1179, 1e-05
    %v1182 = vadd.f32 %v1180, 1e-05
    %v1183 = vrsqrt.pop %v1181
    %v1184 = vrsqrt.pop %v1182
    %v1185 = vmul.f32 %v1169, %v1183
    %v1186 = vmul.f32 %v1170, %v1184
    %v1187 = vlaneseq
    %v1188 = vshrl.u32 %v1187, 7
    %v1189 = vsub.s32 4, %v1188
    %v1190 = vrot.slane %v44, %v1189
    %v1191 = vmul.f32 %v1185, %v1190
    %v1192 = vmul.f32 %v1186, %v1190
    %v1193 = vlaneseq
    %v1194 = vshrl.u32 %v1193, 7
    %v1195 = vsub.s32 5, %v1194
    %v1196 = vrot.slane %v44, %v1195
    %v1197 = vadd.f32 %v1191, %v1196
    %v1198 = vadd.f32 %v1192, %v1196
    %v1199 = vpack.c.bf16 %v1198, %v1197
    %v1200 = vld [vmem:[#allocation2] sm:$0xf]
    %v1201 = vld [vmem:[#allocation2 + $0x4] sm:$0xf]
    %v1202 = vld [vmem:[#allocation2 + $0x8] sm:$0xf]
    %v1203 = vld [vmem:[#allocation2 + $0xc] sm:$0xf]
    %v1204 = vlaneseq
    %v1205 = vshrl.u32 %v1204, 7
    %v1206 = vsub.s32 2, %v1205
    %v1207 = vrot.slane %v44, %v1206
    %v1212 = vunpack.c.l.b16 %v1200
    %v1213 = vunpack.c.l.b16 %v1201
    %v1214 = vunpack.c.l.b16 %v1202
    %v1215 = vunpack.c.l.b16 %v1203
    %v1216 = vpack.c.b16 %v1213, %v1212
    %v1217 = vpack.c.b16 %v1215, %v1214
    %v1221 = vsel %vm66, %v1199, 0
    %1223 = vmatprep.subr.bf16.mxu0 0
    %1224 = vmatpush1.bf16.msra.mxu0 %v1216
    %1225 = vmatprep.subr.bf16.mxu0 0
    %1226 = vmatpush1.bf16.msra.mxu0 %v1217
    %1227 = vmatprep.subr.bf16.mxu0 0
    %1228 = vmatpush1.bf16.msra.mxu0 0
    %1229 = vmatprep.subr.bf16.mxu0 0
    %1230 = vmatpush1.bf16.msra.mxu0 0
    %1231 = vmatprep.subr.bf16.mxu0 0
    %1232 = vmatpush1.bf16.msra.mxu0 0
    %1233 = vmatprep.subr.bf16.mxu0 0
    %1234 = vmatpush1.bf16.msra.mxu0 0
    %1235 = vmatprep.subr.bf16.mxu0 0
    %1236 = vmatpush1.bf16.msra.mxu0 0
    %1237 = vmatprep.subr.bf16.mxu0 0
    %1238 = vmatpush1.bf16.msra.mxu0 0
    %1239 = vmatprep.subr.bf16.mxu0 0
    %1240 = vmatpush1.bf16.msra.mxu0 0
    %1241 = vmatprep.subr.bf16.mxu0 0
    %1242 = vmatpush1.bf16.msra.mxu0 0
    %1243 = vmatprep.subr.bf16.mxu0 0
    %1244 = vmatpush1.bf16.msra.mxu0 0
    %1245 = vmatprep.subr.bf16.mxu0 0
    %1246 = vmatpush1.bf16.msra.mxu0 0
    %1247 = vmatprep.subr.bf16.mxu0 0
    %1248 = vmatpush1.bf16.msra.mxu0 0
    %1249 = vmatprep.subr.bf16.mxu0 0
    %1250 = vmatpush1.bf16.msra.mxu0 0
    %1251 = vmatprep.subr.bf16.mxu0 0
    %1252 = vmatpush1.bf16.msra.mxu0 0
    %1253 = vmatprep.subr.bf16.mxu0 0
    %1254 = vmatpush1.bf16.msra.mxu0 0
    %1255 = vmatprep.mubr.bf16.mxu0 0
    %1256 = vmatmul.mubr.bf16.gmra.mrb[0].mxu0 %v1221
    %v1257 = vpop.f32.mrb[0].mxu0
    %v1258 = vadd.f32 %v1207, %v1257
    %v1259 = vpop.f32.mrb[0].mxu0
    %v1260 = vpop.f32.mrb[0].mxu0
    %v1261 = vadd.f32 %v1207, %v1260
    %v1262 = vpop.f32.mrb[0].mxu0
    %1263 = vdwg.mxu0
    %v1264 = vmul.f32 %v1258, 0.5
    %v1265 = vmul.f32 %v1261, 0.5
    %v1266 = vmul.f32 %v1258, 0.044715
    %v1267 = vmul.f32 %v1261, 0.044715
    %v1268 = vmul.f32 %v1266, %v1258
    %v1269 = vmul.f32 %v1267, %v1261
    %v1270 = vmul.f32 %v1268, %v1258
    %v1271 = vmul.f32 %v1269, %v1261
    %v1272 = vadd.f32 %v1258, %v1270
    %v1273 = vadd.f32 %v1261, %v1271
    %v1274 = vmul.f32 %v1272, 0.7978846
    %v1275 = vmul.f32 %v1273, 0.7978846
    %v1276 = vtanh.pop %v1274
    %v1277 = vtanh.pop %v1275
    %v1278 = vadd.f32 %v1276, 1.0
    %v1279 = vadd.f32 %v1277, 1.0
    %v1280 = vmul.f32 %v1264, %v1278
    %v1281 = vmul.f32 %v1265, %v1279
    %v1282 = vpack.c.bf16 %v1281, %v1280
    %v1283 = vld [vmem:[%s4] sm:$0xf]
    %v1284 = vld [vmem:[%s4 + $0x4] sm:$0xf]
    %v1285 = vld [vmem:[%s4 + $0x8] sm:$0xf]
    %v1286 = vld [vmem:[%s4 + $0xc] sm:$0xf]
    %v1287 = vld [vmem:[%s4 + $0x10] sm:$0xf]
    %v1288 = vld [vmem:[%s4 + $0x14] sm:$0xf]
    %v1289 = vld [vmem:[%s4 + $0x18] sm:$0xf]
    %v1290 = vld [vmem:[%s4 + $0x1c] sm:$0xf]
    %v1291 = vlaneseq
    %v1292 = vshrl.u32 %v1291, 7
    %v1293 = vsub.s32 3, %v1292
    %v1294 = vrot.slane %v44, %v1293
    %v1303 = vunpack.c.l.b16 %v1283
    %v1304 = vunpack.c.l.b16 %v1284
    %v1305 = vunpack.c.l.b16 %v1285
    %v1306 = vunpack.c.l.b16 %v1286
    %v1307 = vunpack.c.l.b16 %v1287
    %v1308 = vunpack.c.l.b16 %v1288
    %v1309 = vunpack.c.l.b16 %v1289
    %v1310 = vunpack.c.l.b16 %v1290
    %v1311 = vpack.c.b16 %v1304, %v1303
    %v1312 = vpack.c.b16 %v1306, %v1305
    %v1313 = vpack.c.b16 %v1308, %v1307
    %v1314 = vpack.c.b16 %v1310, %v1309
    %vm1319 = vcmask 523264
    %v1321 = vsel %vm1319, %v1282, 0
    %1323 = vmatprep.subr.bf16.mxu0 0
    %1324 = vmatpush1.bf16.msra.mxu0 %v1311
    %1325 = vmatprep.subr.bf16.mxu0 0
    %1326 = vmatpush1.bf16.msra.mxu0 %v1312
    %1327 = vmatprep.subr.bf16.mxu0 0
    %1328 = vmatpush1.bf16.msra.mxu0 %v1313
    %1329 = vmatprep.subr.bf16.mxu0 0
    %1330 = vmatpush1.bf16.msra.mxu0 %v1314
    %1331 = vmatprep.subr.bf16.mxu0 0
    %1332 = vmatpush1.bf16.msra.mxu0 0
    %1333 = vmatprep.subr.bf16.mxu0 0
    %1334 = vmatpush1.bf16.msra.mxu0 0
    %1335 = vmatprep.subr.bf16.mxu0 0
    %1336 = vmatpush1.bf16.msra.mxu0 0
    %1337 = vmatprep.subr.bf16.mxu0 0
    %1338 = vmatpush1.bf16.msra.mxu0 0
    %1339 = vmatprep.subr.bf16.mxu0 0
    %1340 = vmatpush1.bf16.msra.mxu0 0
    %1341 = vmatprep.subr.bf16.mxu0 0
    %1342 = vmatpush1.bf16.msra.mxu0 0
    %1343 = vmatprep.subr.bf16.mxu0 0
    %1344 = vmatpush1.bf16.msra.mxu0 0
    %1345 = vmatprep.subr.bf16.mxu0 0
    %1346 = vmatpush1.bf16.msra.mxu0 0
    %1347 = vmatprep.subr.bf16.mxu0 0
    %1348 = vmatpush1.bf16.msra.mxu0 0
    %1349 = vmatprep.subr.bf16.mxu0 0
    %1350 = vmatpush1.bf16.msra.mxu0 0
    %1351 = vmatprep.subr.bf16.mxu0 0
    %1352 = vmatpush1.bf16.msra.mxu0 0
    %1353 = vmatprep.subr.bf16.mxu0 0
    %1354 = vmatpush1.bf16.msra.mxu0 0
    %1355 = vmatprep.mubr.bf16.mxu0 0
    %1356 = vmatmul.mubr.bf16.gmra.mrb[0].mxu0 %v1321
    %v1357 = vpop.f32.mrb[0].mxu0
    %v1358 = vadd.f32 %v1294, %v1357
    %v1359 = vpop.f32.mrb[0].mxu0
    %v1360 = vpop.f32.mrb[0].mxu0
    %v1361 = vadd.f32 %v1294, %v1360
    %v1362 = vpop.f32.mrb[0].mxu0
    %1363 = vdwg.mxu0
    %v1364 = vsel %vm66, %v1358, 0.0
    %1365 = vadd.xlane.f32.xlu0 %v1364
    %v1366 = vpop.xlane.xlu0 %1365
    %v1367 = vsel %vm66, %v1361, 0.0
    %1368 = vadd.xlane.f32.xlu0 %v1367
    %v1369 = vpop.xlane.xlu0 %1368
    %v1370 = vmul.f32 %v1366, %v1166
    %v1371 = vmul.f32 %v1369, %v1166
    %v1372 = vsub.f32 %v1358, %v1370
    %v1373 = vsub.f32 %v1361, %v1371
    %v1374 = vmul.f32 %v1372, %v1372
    %v1375 = vmul.f32 %v1373, %v1373
    %v1376 = vsel %vm66, %v1374, 0.0
    %1377 = vadd.xlane.f32.xlu0 %v1376
    %v1378 = vpop.xlane.xlu0 %1377
    %v1379 = vsel %vm66, %v1375, 0.0
    %1380 = vadd.xlane.f32.xlu0 %v1379
    %v1381 = vpop.xlane.xlu0 %1380
    %v1382 = vmul.f32 %v1378, %v1166
    %v1383 = vmul.f32 %v1381, %v1166
    %v1384 = vadd.f32 %v1382, 1e-05
    %v1385 = vadd.f32 %v1383, 1e-05
    %v1386 = vrsqrt.pop %v1384
    %v1387 = vrsqrt.pop %v1385
    %v1388 = vmul.f32 %v1372, %v1386
    %v1389 = vmul.f32 %v1373, %v1387
    %v1390 = vlaneseq
    %v1391 = vshrl.u32 %v1390, 7
    %v1392 = vsub.s32 6, %v1391
    %v1393 = vrot.slane %v44, %v1392
    %v1394 = vmul.f32 %v1388, %v1393
    %v1395 = vmul.f32 %v1389, %v1393
    %v1396 = vlaneseq
    %v1397 = vshrl.u32 %v1396, 7
    %v1398 = vsub.s32 7, %v1397
    %v1399 = vrot.slane %v44, %v1398
    %v1400 = vadd.f32 %v1394, %v1399
    %v1401 = vadd.f32 %v1395, %v1399
    %1402 = vst.msk [vmem:[#allocation5] sm:$0xff] %vm66, %v1400
    %1403 = vst.msk [vmem:[#allocation5 + $0x8] sm:$0xff] %vm66, %v1401
    // Predicated region
    $region30: #{tpu_custom_call.1} parent=1 // pred_check
      _
    $region31: #{tpu_custom_call.1} parent=1 // pred_check_branch
      %1405 = sbr.rel (0) target = $region33
    $region32: #{tpu_custom_call.1} parent=1 // pred_region
      %s1407 = ssub.s32 256, 256
      %1408 = vsyncadd [#allocation4], %s1407
      %s1409 = sshll.u32 [#allocation5], 4
      %s1410 = int_to_ptr.vmem [resolvable:$true] %s1409
      %1415 = dma.vmem_to_hbm [thread:$0]  %s1410, 256, %s6, [#allocation4], 128, 128, 8
    $region33: #{tpu_custom_call.1} parent=1 // pred_fallthru
      _
    // Predicated region
    $region34: #{tpu_custom_call.1} parent=1 // pred_check
      _
    $region35: #{tpu_custom_call.1} parent=1 // pred_check_branch
      %1417 = sbr.rel (0) target = $region37
    $region36: #{tpu_custom_call.1} parent=1 // pred_region
      %s1419 = ssub.s32 256, 256
      %1420 = vsyncadd [#allocation7], %s1419
      %s1421 = sshll.u32 [#allocation6], 4
      %s1422 = int_to_ptr.vmem [resolvable:$true] %s1421
      %1427 = dma.vmem_to_hbm [thread:$0]  %s1422, 256, %s7, [#allocation7], 128, 128, 8
    $region37: #{tpu_custom_call.1} parent=1 // pred_fallthru
      _
    // Predicated region
    $region38: #{tpu_custom_call.1} parent=1 // pred_check
      _
    $region39: #{tpu_custom_call.1} parent=1 // pred_check_branch
      %1429 = sbr.rel (0) target = $region41
    $region40: #{tpu_custom_call.1} parent=1 // pred_region
      %1430 = dma.done [#allocation4], 256
    $region41: #{tpu_custom_call.1} parent=1 // pred_fallthru
      _
    // Predicated region
    $region42: #{tpu_custom_call.1} parent=1 // pred_check
      _
    $region43: #{tpu_custom_call.1} parent=1 // pred_check_branch
      %1432 = sbr.rel (0) target = $region45
    $region44: #{tpu_custom_call.1} parent=1 // pred_region
      %1433 = dma.done [#allocation7], 256
    $region45: #{tpu_custom_call.1} parent=1 // pred_fallthru
      _
    %1434 = vsyncpa [#allocation3], 1
    %1435 = vsyncpa [#allocation4], 1
    %1436 = vsyncpa [#allocation7], 1

</llo_original>
